<compile_context>
chip_gen: v7x
topology: tpu7x:2x2x1
jax: 0.10.0
libtpu: 0.0.40
codegen_flags: <defaults>
</compile_context>

<pallas_src>
import functools

import jax
import jax.numpy as jnp
from jax.experimental import pallas as pl
from jax.experimental.pallas import tpu as pltpu


def facconv_ref(x, w1, w2, b2, gamma, beta, *, stride, padding,
                groups=32, eps=1e-5):
    """Pure-JAX reference (mirrors the PyTorch module)."""
    dn = ("NCHW", "OIHW", "NCHW")
    pad2 = [(padding, padding), (padding, padding)]
    xr = jnp.maximum(x, 0.0)
    y1 = jax.lax.conv_general_dilated(xr, w1, (stride, stride), pad2,
                                      dimension_numbers=dn)
    y2 = jax.lax.conv_general_dilated(y1, w2, (stride, stride), pad2,
                                      dimension_numbers=dn)
    y2 = y2 + b2[None, :, None, None]
    N, C, Hh, Ww = y2.shape
    yg = y2.reshape(N, groups, C // groups, Hh, Ww)
    mu = jnp.mean(yg, axis=(2, 3, 4), keepdims=True)
    var = jnp.mean((yg - mu) ** 2, axis=(2, 3, 4), keepdims=True)
    yn = ((yg - mu) * jax.lax.rsqrt(var + eps)).reshape(N, C, Hh, Ww)
    return yn * gamma[None, :, None, None] + beta[None, :, None, None]


def _facconv_kernel(xc_ref, w1_ref, w2_ref, b2_ref, gamma_ref, beta_ref,
                    rmask_ref, cmask_ref, o_ref, y1c_ref, *,
                    C_in, K, Wc, L2, gs, inv_cnt, eps, add_bias):
    """Fused ReLU + Conv(Kx1) + Conv(1xK)(+bias) + GroupNorm, flattened layout.

    xc_ref    : (1, C_in, Hc*Wc)  zero-padded (by 2p) input canvas, flattened
    w1_ref    : (C_in, C_in*K)    conv1 weights, VMEM
    w2_ref    : (C_blk, C_in*K)   conv2 weights (this channel block), VMEM
    b2/gamma/beta_ref : (C_blk, 1)
    rmask_ref : (1, L2)  1.0 on valid (non vertical-pad) rows of the y1 canvas
    cmask_ref : (1, L2)  1.0 on valid output columns (w < W2)
    o_ref     : (1, C_blk, L2)    over-wide flattened output block
    y1c_ref   : (C_in, L2+K-1)    VMEM scratch: conv1 output canvas (+ zero tail)
    """
    f32 = jnp.float32

    # ---- Stage 1: ReLU + Conv(K x 1) on the flattened canvas -----------------
    # Vertical shift by k rows == static lane offset k*Wc in the flat layout.
    acc1 = jnp.zeros((C_in, L2), f32)
    for ci in range(C_in):
        for k in range(K):
            win = jnp.maximum(
                xc_ref[0, pl.ds(ci, 1), pl.ds(k * Wc, L2)], 0.0)   # (1, L2)
            acc1 = acc1 + w1_ref[:, pl.ds(ci * K + k, 1)] * win     # outer-product FMA
    # Zero the vertical-pad rows and stash into scratch (zero tail lanes included
    # so the over-wide stage-2 reads never see stale VMEM).
    y1c_ref[...] = jnp.zeros_like(y1c_ref)
    y1c_ref[:, pl.ds(0, L2)] = acc1 * rmask_ref[...]

    # ---- Stage 2: Conv(1 x K), channel-vectorized -----------------------------
    # Horizontal shift by k == static lane offset k (over-wide: the K-1
    # row-crossing columns per row are garbage and handled by cmask / wrapper).
    C_blk = w2_ref.shape[0]
    acc2 = jnp.zeros((C_blk, L2), f32)
    for ci in range(C_in):
        for k in range(K):
            win = y1c_ref[pl.ds(ci, 1), pl.ds(k, L2)]               # (1, L2)
            acc2 = acc2 + w2_ref[:, pl.ds(ci * K + k, 1)] * win
    if add_bias:  # gs == 1: per-channel GroupNorm cancels the bias exactly
        acc2 = acc2 + b2_ref[...]

    # ---- Stage 3: GroupNorm over the valid columns ----------------------------
    cmask = cmask_ref[...]                                          # (1, L2)
    ch_sum = jnp.sum(acc2 * cmask, axis=-1, keepdims=True)          # (C_blk, 1)
    if gs == 1:
        mu = ch_sum * inv_cnt
    else:
        grp = jnp.sum(ch_sum.reshape(C_blk // gs, gs), axis=-1, keepdims=True)
        mu = jnp.broadcast_to(grp * inv_cnt, (C_blk // gs, gs)).reshape(C_blk, 1)
    diff = acc2 - mu
    ssq = jnp.sum(diff * diff * cmask, axis=-1, keepdims=True)      # (C_blk, 1)
    if gs == 1:
        var = ssq * inv_cnt
    else:
        gssq = jnp.sum(ssq.reshape(C_blk // gs, gs), axis=-1, keepdims=True)
        var = jnp.broadcast_to(gssq * inv_cnt, (C_blk // gs, gs)).reshape(C_blk, 1)
    inv = jax.lax.rsqrt(var + eps)                                  # EUP
    scale = inv * gamma_ref[...]
    o_ref[0] = (diff * scale + beta_ref[...]).astype(o_ref.dtype)


def facconv_forward(x, w1, w2, b2, gamma, beta, *, stride, padding,
                    groups=32, eps=1e-5):
    """FacConv.forward: ReLU -> Conv2d(C_in,C_in,(K,1),s,p,bias=False)
                         -> Conv2d(C_in,C_out,(1,K),s,p) -> GroupNorm(32,C_out)."""
    N, C_in, H, W = x.shape
    C_out = w2.shape[0]
    K = w1.shape[2]
    assert w1.shape == (C_in, C_in, K, 1)
    assert w2.shape == (C_out, C_in, 1, K)
    assert C_out % groups == 0
    gs = C_out // groups
    p = padding

    if stride != 1:
        # TODO(synk): stride > 1 breaks the static lane-shift windowing of the
        # flattened layout; fall back to the XLA reference for that config.
        return facconv_ref(x, w1, w2, b2, gamma, beta, stride=stride,
                           padding=padding, groups=groups, eps=eps)

    # Shapes (stride == 1).
    Hc, Wc = H + 4 * p, W + 4 * p            # input canvas (x padded by 2p)
    H1, W1 = H + 2 * p - K + 1, W + 2 * p    # conv1 output
    H2, W2 = H1 + 2 * p, W1 + 2 * p - K + 1  # conv2 output
    Lc, L2 = Hc * Wc, H2 * Wc                # flat canvas / flat (over-wide) output
    assert Hc == H2 + K - 1 and Wc == W1 + 2 * p

    f32 = jnp.float32
    # Input canvas: zero-pad by 2p on H and W and flatten the spatial dims.
    xc = jnp.pad(x, ((0, 0), (0, 0), (2 * p, 2 * p), (2 * p, 2 * p)))
    xc = xc.reshape(N, C_in, Lc)

    w1m = w1.reshape(C_in, C_in * K).astype(f32)      # [oc, ci*K + k]
    w2m = w2.reshape(C_out, C_in * K).astype(f32)     # [oc, ci*K + k]
    b2c = b2.reshape(C_out, 1).astype(f32)
    gammac = gamma.reshape(C_out, 1).astype(f32)
    betac = beta.reshape(C_out, 1).astype(f32)

    # Row mask: valid (non vertical-pad) rows of the y1 canvas.
    rows = jnp.arange(H2)
    rmask = ((rows >= p) & (rows < H2 - p)).astype(f32)[:, None]
    rmask = jnp.broadcast_to(rmask, (H2, Wc)).reshape(1, L2)
    # Column mask: valid output columns (drop the K-1 over-wide garbage cols).
    cols = jnp.arange(Wc)
    cmask = (cols < W2).astype(f32)[None, :]
    cmask = jnp.broadcast_to(cmask, (H2, Wc)).reshape(1, L2)

    # Channel split -> second parallel grid axis (keeps both v7x TensorCores
    # busy for small/odd N).  Must keep whole groups and an 8-multiple sublane
    # block per step.
    c_split = 2 if (C_out % 2 == 0 and (C_out // 2) % gs == 0
                    and (C_out // 2) % 8 == 0) else 1
    C_blk = C_out // c_split

    kernel = functools.partial(
        _facconv_kernel, C_in=C_in, K=K, Wc=Wc, L2=L2, gs=gs,
        inv_cnt=1.0 / float(gs * H2 * W2), eps=float(eps), add_bias=(gs > 1))

    out_flat = pl.pallas_call(
        kernel,
        out_shape=jax.ShapeDtypeStruct((N, C_out, L2), x.dtype),
        grid=(N, c_split),
        in_specs=[
            pl.BlockSpec((1, C_in, Lc), lambda n, c: (n, 0, 0)),
            pl.BlockSpec((C_in, C_in * K), lambda n, c: (0, 0)),
            pl.BlockSpec((C_blk, C_in * K), lambda n, c: (c, 0)),
            pl.BlockSpec((C_blk, 1), lambda n, c: (c, 0)),
            pl.BlockSpec((C_blk, 1), lambda n, c: (c, 0)),
            pl.BlockSpec((C_blk, 1), lambda n, c: (c, 0)),
            pl.BlockSpec((1, L2), lambda n, c: (0, 0)),
            pl.BlockSpec((1, L2), lambda n, c: (0, 0)),
        ],
        out_specs=pl.BlockSpec((1, C_blk, L2), lambda n, c: (n, c, 0)),
        scratch_shapes=[pltpu.VMEM((C_in, L2 + K - 1), f32)],
        compiler_params=pltpu.CompilerParams(
            dimension_semantics=("parallel", "parallel")),
    )(xc, w1m, w2m, b2c, gammac, betac, rmask, cmask)

    # Un-flatten and drop the K-1 over-wide garbage columns per output row.
    out = out_flat.reshape(N, C_out, H2, Wc)[:, :, :, :W2]
    return out


if __name__ == "__main__":
    key = jax.random.PRNGKey(0)
    k1, k2, k3, k4, k5, kx = jax.random.split(key, 6)

    # Small shapes consistent with the module; C_out divisible by 32 because of
    # GroupNorm(32, C_out).
    N, C_in, H, W = 2, 4, 16, 16
    C_out = 32
    kernel_length = 3
    stride, padding = 1, 1

    x = jax.random.normal(kx, (N, C_in, H, W), dtype=jnp.float32)

    bound1 = 1.0 / (C_in * kernel_length * 1) ** 0.5
    w1 = jax.random.uniform(k1, (C_in, C_in, kernel_length, 1), jnp.float32,
                            -bound1, bound1)
    bound2 = 1.0 / (C_in * 1 * kernel_length) ** 0.5
    w2 = jax.random.uniform(k2, (C_out, C_in, 1, kernel_length), jnp.float32,
                            -bound2, bound2)
    b2 = jax.random.uniform(k3, (C_out,), jnp.float32, -bound2, bound2)
    # Non-trivial affine params to exercise the GroupNorm scale/shift path.
    gamma = 1.0 + 0.1 * jax.random.normal(k4, (C_out,), jnp.float32)
    beta = 0.1 * jax.random.normal(k5, (C_out,), jnp.float32)

    out = facconv_forward(x, w1, w2, b2, gamma, beta,
                          stride=stride, padding=padding)
    out = jax.block_until_ready(out)

    ref = facconv_ref(x, w1, w2, b2, gamma, beta,
                      stride=stride, padding=padding)
    assert out.shape == ref.shape == (N, C_out, 18, 18), out.shape
    assert out.dtype == x.dtype
    err = float(jnp.max(jnp.abs(out - ref)))
    assert err < 1e-3, f"max abs err vs reference: {err}"

    print("KERNEL_OK")
</pallas_src>

<mosaic_0001>
module attributes {stable_mosaic.version = 11 : i64} {
  func.func @_facconv_kernel(%arg0: i32, %arg1: i32, %arg2: memref<1x4x400xf32, #tpu.memory_space<vmem>>, %arg3: memref<4x12xf32, #tpu.memory_space<vmem>>, %arg4: memref<16x12xf32, #tpu.memory_space<vmem>>, %arg5: memref<16x1xf32, #tpu.memory_space<vmem>>, %arg6: memref<16x1xf32, #tpu.memory_space<vmem>>, %arg7: memref<16x1xf32, #tpu.memory_space<vmem>>, %arg8: memref<1x360xf32, #tpu.memory_space<vmem>>, %arg9: memref<1x360xf32, #tpu.memory_space<vmem>>, %arg10: memref<1x16x360xf32, #tpu.memory_space<vmem>>, %arg11: memref<4x362xf32, #tpu.memory_space<vmem>>) attributes {dimension_semantics = [#tpu.dimension_semantics<parallel>, #tpu.dimension_semantics<parallel>], iteration_bounds = array<i64: 2, 2>, scalar_prefetch = 0 : i64, scratch_operands = 1 : i64, tpu.core_type = #tpu.core_type<tc>, window_params = [{transform_indices = @transform_0, window_bounds = array<i64: 1, 4, 400>}, {pipeline_mode = #tpu.pipeline_mode<synchronous>, transform_indices = @transform_1, window_bounds = array<i64: 4, 12>}, {transform_indices = @transform_2, window_bounds = array<i64: 16, 12>}, {transform_indices = @transform_3, window_bounds = array<i64: 16, 1>}, {transform_indices = @transform_4, window_bounds = array<i64: 16, 1>}, {transform_indices = @transform_5, window_bounds = array<i64: 16, 1>}, {pipeline_mode = #tpu.pipeline_mode<synchronous>, transform_indices = @transform_6, window_bounds = array<i64: 1, 360>}, {pipeline_mode = #tpu.pipeline_mode<synchronous>, transform_indices = @transform_7, window_bounds = array<i64: 1, 360>}, {transform_indices = @transform_8, window_bounds = array<i64: 1, 16, 360>}]} {
    %cst = arith.constant 0.000000e+00 : f32
    %0 = vector.broadcast %cst : f32 to vector<4x360xf32>
    %c0 = arith.constant 0 : index
    %c0_0 = arith.constant 0 : index
    %c0_1 = arith.constant 0 : index
    %1 = vector.load %arg2[%c0, %c0_0, %c0_1] : memref<1x4x400xf32, #tpu.memory_space<vmem>>, vector<1x1x360xf32>
    %2 = vector.shape_cast %1 : vector<1x1x360xf32> to vector<1x360xf32>
    %cst_2 = arith.constant 0.000000e+00 : f32
    %3 = vector.broadcast %cst_2 : f32 to vector<1x360xf32>
    %4 = arith.maximumf %2, %3 : vector<1x360xf32>
    %c0_3 = arith.constant 0 : index
    %c0_4 = arith.constant 0 : index
    %5 = vector.load %arg3[%c0_3, %c0_4] : memref<4x12xf32, #tpu.memory_space<vmem>>, vector<4x1xf32>
    %6 = vector.broadcast %5 : vector<4x1xf32> to vector<4x360xf32>
    %7 = vector.broadcast %4 : vector<1x360xf32> to vector<4x360xf32>
    %8 = arith.mulf %6, %7 : vector<4x360xf32>
    %9 = arith.addf %0, %8 : vector<4x360xf32>
    %c0_5 = arith.constant 0 : index
    %c0_6 = arith.constant 0 : index
    %c20 = arith.constant 20 : index
    %10 = vector.load %arg2[%c0_5, %c0_6, %c20] : memref<1x4x400xf32, #tpu.memory_space<vmem>>, vector<1x1x360xf32>
    %11 = vector.shape_cast %10 : vector<1x1x360xf32> to vector<1x360xf32>
    %cst_7 = arith.constant 0.000000e+00 : f32
    %12 = vector.broadcast %cst_7 : f32 to vector<1x360xf32>
    %13 = arith.maximumf %11, %12 : vector<1x360xf32>
    %c0_8 = arith.constant 0 : index
    %c1 = arith.constant 1 : index
    %14 = vector.load %arg3[%c0_8, %c1] : memref<4x12xf32, #tpu.memory_space<vmem>>, vector<4x1xf32>
    %15 = vector.broadcast %14 : vector<4x1xf32> to vector<4x360xf32>
    %16 = vector.broadcast %13 : vector<1x360xf32> to vector<4x360xf32>
    %17 = arith.mulf %15, %16 : vector<4x360xf32>
    %18 = arith.addf %9, %17 : vector<4x360xf32>
    %c0_9 = arith.constant 0 : index
    %c0_10 = arith.constant 0 : index
    %c40 = arith.constant 40 : index
    %19 = vector.load %arg2[%c0_9, %c0_10, %c40] : memref<1x4x400xf32, #tpu.memory_space<vmem>>, vector<1x1x360xf32>
    %20 = vector.shape_cast %19 : vector<1x1x360xf32> to vector<1x360xf32>
    %cst_11 = arith.constant 0.000000e+00 : f32
    %21 = vector.broadcast %cst_11 : f32 to vector<1x360xf32>
    %22 = arith.maximumf %20, %21 : vector<1x360xf32>
    %c0_12 = arith.constant 0 : index
    %c2 = arith.constant 2 : index
    %23 = vector.load %arg3[%c0_12, %c2] : memref<4x12xf32, #tpu.memory_space<vmem>>, vector<4x1xf32>
    %24 = vector.broadcast %23 : vector<4x1xf32> to vector<4x360xf32>
    %25 = vector.broadcast %22 : vector<1x360xf32> to vector<4x360xf32>
    %26 = arith.mulf %24, %25 : vector<4x360xf32>
    %27 = arith.addf %18, %26 : vector<4x360xf32>
    %c0_13 = arith.constant 0 : index
    %c1_14 = arith.constant 1 : index
    %c0_15 = arith.constant 0 : index
    %28 = vector.load %arg2[%c0_13, %c1_14, %c0_15] : memref<1x4x400xf32, #tpu.memory_space<vmem>>, vector<1x1x360xf32>
    %29 = vector.shape_cast %28 : vector<1x1x360xf32> to vector<1x360xf32>
    %cst_16 = arith.constant 0.000000e+00 : f32
    %30 = vector.broadcast %cst_16 : f32 to vector<1x360xf32>
    %31 = arith.maximumf %29, %30 : vector<1x360xf32>
    %c0_17 = arith.constant 0 : index
    %c3 = arith.constant 3 : index
    %32 = vector.load %arg3[%c0_17, %c3] : memref<4x12xf32, #tpu.memory_space<vmem>>, vector<4x1xf32>
    %33 = vector.broadcast %32 : vector<4x1xf32> to vector<4x360xf32>
    %34 = vector.broadcast %31 : vector<1x360xf32> to vector<4x360xf32>
    %35 = arith.mulf %33, %34 : vector<4x360xf32>
    %36 = arith.addf %27, %35 : vector<4x360xf32>
    %c0_18 = arith.constant 0 : index
    %c1_19 = arith.constant 1 : index
    %c20_20 = arith.constant 20 : index
    %37 = vector.load %arg2[%c0_18, %c1_19, %c20_20] : memref<1x4x400xf32, #tpu.memory_space<vmem>>, vector<1x1x360xf32>
    %38 = vector.shape_cast %37 : vector<1x1x360xf32> to vector<1x360xf32>
    %cst_21 = arith.constant 0.000000e+00 : f32
    %39 = vector.broadcast %cst_21 : f32 to vector<1x360xf32>
    %40 = arith.maximumf %38, %39 : vector<1x360xf32>
    %c0_22 = arith.constant 0 : index
    %c4 = arith.constant 4 : index
    %41 = vector.load %arg3[%c0_22, %c4] : memref<4x12xf32, #tpu.memory_space<vmem>>, vector<4x1xf32>
    %42 = vector.broadcast %41 : vector<4x1xf32> to vector<4x360xf32>
    %43 = vector.broadcast %40 : vector<1x360xf32> to vector<4x360xf32>
    %44 = arith.mulf %42, %43 : vector<4x360xf32>
    %45 = arith.addf %36, %44 : vector<4x360xf32>
    %c0_23 = arith.constant 0 : index
    %c1_24 = arith.constant 1 : index
    %c40_25 = arith.constant 40 : index
    %46 = vector.load %arg2[%c0_23, %c1_24, %c40_25] : memref<1x4x400xf32, #tpu.memory_space<vmem>>, vector<1x1x360xf32>
    %47 = vector.shape_cast %46 : vector<1x1x360xf32> to vector<1x360xf32>
    %cst_26 = arith.constant 0.000000e+00 : f32
    %48 = vector.broadcast %cst_26 : f32 to vector<1x360xf32>
    %49 = arith.maximumf %47, %48 : vector<1x360xf32>
    %c0_27 = arith.constant 0 : index
    %c5 = arith.constant 5 : index
    %50 = vector.load %arg3[%c0_27, %c5] : memref<4x12xf32, #tpu.memory_space<vmem>>, vector<4x1xf32>
    %51 = vector.broadcast %50 : vector<4x1xf32> to vector<4x360xf32>
    %52 = vector.broadcast %49 : vector<1x360xf32> to vector<4x360xf32>
    %53 = arith.mulf %51, %52 : vector<4x360xf32>
    %54 = arith.addf %45, %53 : vector<4x360xf32>
    %c0_28 = arith.constant 0 : index
    %c2_29 = arith.constant 2 : index
    %c0_30 = arith.constant 0 : index
    %55 = vector.load %arg2[%c0_28, %c2_29, %c0_30] : memref<1x4x400xf32, #tpu.memory_space<vmem>>, vector<1x1x360xf32>
    %56 = vector.shape_cast %55 : vector<1x1x360xf32> to vector<1x360xf32>
    %cst_31 = arith.constant 0.000000e+00 : f32
    %57 = vector.broadcast %cst_31 : f32 to vector<1x360xf32>
    %58 = arith.maximumf %56, %57 : vector<1x360xf32>
    %c0_32 = arith.constant 0 : index
    %c6 = arith.constant 6 : index
    %59 = vector.load %arg3[%c0_32, %c6] : memref<4x12xf32, #tpu.memory_space<vmem>>, vector<4x1xf32>
    %60 = vector.broadcast %59 : vector<4x1xf32> to vector<4x360xf32>
    %61 = vector.broadcast %58 : vector<1x360xf32> to vector<4x360xf32>
    %62 = arith.mulf %60, %61 : vector<4x360xf32>
    %63 = arith.addf %54, %62 : vector<4x360xf32>
    %c0_33 = arith.constant 0 : index
    %c2_34 = arith.constant 2 : index
    %c20_35 = arith.constant 20 : index
    %64 = vector.load %arg2[%c0_33, %c2_34, %c20_35] : memref<1x4x400xf32, #tpu.memory_space<vmem>>, vector<1x1x360xf32>
    %65 = vector.shape_cast %64 : vector<1x1x360xf32> to vector<1x360xf32>
    %cst_36 = arith.constant 0.000000e+00 : f32
    %66 = vector.broadcast %cst_36 : f32 to vector<1x360xf32>
    %67 = arith.maximumf %65, %66 : vector<1x360xf32>
    %c0_37 = arith.constant 0 : index
    %c7 = arith.constant 7 : index
    %68 = vector.load %arg3[%c0_37, %c7] : memref<4x12xf32, #tpu.memory_space<vmem>>, vector<4x1xf32>
    %69 = vector.broadcast %68 : vector<4x1xf32> to vector<4x360xf32>
    %70 = vector.broadcast %67 : vector<1x360xf32> to vector<4x360xf32>
    %71 = arith.mulf %69, %70 : vector<4x360xf32>
    %72 = arith.addf %63, %71 : vector<4x360xf32>
    %c0_38 = arith.constant 0 : index
    %c2_39 = arith.constant 2 : index
    %c40_40 = arith.constant 40 : index
    %73 = vector.load %arg2[%c0_38, %c2_39, %c40_40] : memref<1x4x400xf32, #tpu.memory_space<vmem>>, vector<1x1x360xf32>
    %74 = vector.shape_cast %73 : vector<1x1x360xf32> to vector<1x360xf32>
    %cst_41 = arith.constant 0.000000e+00 : f32
    %75 = vector.broadcast %cst_41 : f32 to vector<1x360xf32>
    %76 = arith.maximumf %74, %75 : vector<1x360xf32>
    %c0_42 = arith.constant 0 : index
    %c8 = arith.constant 8 : index
    %77 = vector.load %arg3[%c0_42, %c8] : memref<4x12xf32, #tpu.memory_space<vmem>>, vector<4x1xf32>
    %78 = vector.broadcast %77 : vector<4x1xf32> to vector<4x360xf32>
    %79 = vector.broadcast %76 : vector<1x360xf32> to vector<4x360xf32>
    %80 = arith.mulf %78, %79 : vector<4x360xf32>
    %81 = arith.addf %72, %80 : vector<4x360xf32>
    %c0_43 = arith.constant 0 : index
    %c3_44 = arith.constant 3 : index
    %c0_45 = arith.constant 0 : index
    %82 = vector.load %arg2[%c0_43, %c3_44, %c0_45] : memref<1x4x400xf32, #tpu.memory_space<vmem>>, vector<1x1x360xf32>
    %83 = vector.shape_cast %82 : vector<1x1x360xf32> to vector<1x360xf32>
    %cst_46 = arith.constant 0.000000e+00 : f32
    %84 = vector.broadcast %cst_46 : f32 to vector<1x360xf32>
    %85 = arith.maximumf %83, %84 : vector<1x360xf32>
    %c0_47 = arith.constant 0 : index
    %c9 = arith.constant 9 : index
    %86 = vector.load %arg3[%c0_47, %c9] : memref<4x12xf32, #tpu.memory_space<vmem>>, vector<4x1xf32>
    %87 = vector.broadcast %86 : vector<4x1xf32> to vector<4x360xf32>
    %88 = vector.broadcast %85 : vector<1x360xf32> to vector<4x360xf32>
    %89 = arith.mulf %87, %88 : vector<4x360xf32>
    %90 = arith.addf %81, %89 : vector<4x360xf32>
    %c0_48 = arith.constant 0 : index
    %c3_49 = arith.constant 3 : index
    %c20_50 = arith.constant 20 : index
    %91 = vector.load %arg2[%c0_48, %c3_49, %c20_50] : memref<1x4x400xf32, #tpu.memory_space<vmem>>, vector<1x1x360xf32>
    %92 = vector.shape_cast %91 : vector<1x1x360xf32> to vector<1x360xf32>
    %cst_51 = arith.constant 0.000000e+00 : f32
    %93 = vector.broadcast %cst_51 : f32 to vector<1x360xf32>
    %94 = arith.maximumf %92, %93 : vector<1x360xf32>
    %c0_52 = arith.constant 0 : index
    %c10 = arith.constant 10 : index
    %95 = vector.load %arg3[%c0_52, %c10] : memref<4x12xf32, #tpu.memory_space<vmem>>, vector<4x1xf32>
    %96 = vector.broadcast %95 : vector<4x1xf32> to vector<4x360xf32>
    %97 = vector.broadcast %94 : vector<1x360xf32> to vector<4x360xf32>
    %98 = arith.mulf %96, %97 : vector<4x360xf32>
    %99 = arith.addf %90, %98 : vector<4x360xf32>
    %c0_53 = arith.constant 0 : index
    %c3_54 = arith.constant 3 : index
    %c40_55 = arith.constant 40 : index
    %100 = vector.load %arg2[%c0_53, %c3_54, %c40_55] : memref<1x4x400xf32, #tpu.memory_space<vmem>>, vector<1x1x360xf32>
    %101 = vector.shape_cast %100 : vector<1x1x360xf32> to vector<1x360xf32>
    %cst_56 = arith.constant 0.000000e+00 : f32
    %102 = vector.broadcast %cst_56 : f32 to vector<1x360xf32>
    %103 = arith.maximumf %101, %102 : vector<1x360xf32>
    %c0_57 = arith.constant 0 : index
    %c11 = arith.constant 11 : index
    %104 = vector.load %arg3[%c0_57, %c11] : memref<4x12xf32, #tpu.memory_space<vmem>>, vector<4x1xf32>
    %105 = vector.broadcast %104 : vector<4x1xf32> to vector<4x360xf32>
    %106 = vector.broadcast %103 : vector<1x360xf32> to vector<4x360xf32>
    %107 = arith.mulf %105, %106 : vector<4x360xf32>
    %108 = arith.addf %99, %107 : vector<4x360xf32>
    %cst_58 = arith.constant 0.000000e+00 : f32
    %109 = vector.broadcast %cst_58 : f32 to vector<4x362xf32>
    %c0_59 = arith.constant 0 : index
    %c0_60 = arith.constant 0 : index
    %110 = vector.load %arg11[%c0_59, %c0_60] : memref<4x362xf32, #tpu.memory_space<vmem>>, vector<4x362xf32>
    tpu.vector_store %arg11[%c0_59, %c0_60], %109 {strides = array<i32>} : memref<4x362xf32, #tpu.memory_space<vmem>>, vector<4x362xf32>,
    %c0_61 = arith.constant 0 : index
    %c0_62 = arith.constant 0 : index
    %111 = vector.load %arg8[%c0_61, %c0_62] : memref<1x360xf32, #tpu.memory_space<vmem>>, vector<1x360xf32>
    %112 = vector.broadcast %111 : vector<1x360xf32> to vector<4x360xf32>
    %113 = arith.mulf %108, %112 : vector<4x360xf32>
    %c0_63 = arith.constant 0 : index
    %c0_64 = arith.constant 0 : index
    %114 = vector.load %arg11[%c0_63, %c0_64] : memref<4x362xf32, #tpu.memory_space<vmem>>, vector<4x360xf32>
    tpu.vector_store %arg11[%c0_63, %c0_64], %113 {strides = array<i32>} : memref<4x362xf32, #tpu.memory_space<vmem>>, vector<4x360xf32>,
    %cst_65 = arith.constant 0.000000e+00 : f32
    %115 = vector.broadcast %cst_65 : f32 to vector<16x360xf32>
    %c0_66 = arith.constant 0 : index
    %c0_67 = arith.constant 0 : index
    %116 = vector.load %arg11[%c0_66, %c0_67] : memref<4x362xf32, #tpu.memory_space<vmem>>, vector<1x360xf32>
    %c0_68 = arith.constant 0 : index
    %c0_69 = arith.constant 0 : index
    %117 = vector.load %arg4[%c0_68, %c0_69] : memref<16x12xf32, #tpu.memory_space<vmem>>, vector<16x1xf32>
    %118 = vector.broadcast %117 : vector<16x1xf32> to vector<16x360xf32>
    %119 = vector.broadcast %116 : vector<1x360xf32> to vector<16x360xf32>
    %120 = arith.mulf %118, %119 : vector<16x360xf32>
    %121 = arith.addf %115, %120 : vector<16x360xf32>
    %c0_70 = arith.constant 0 : index
    %c1_71 = arith.constant 1 : index
    %122 = vector.load %arg11[%c0_70, %c1_71] : memref<4x362xf32, #tpu.memory_space<vmem>>, vector<1x360xf32>
    %c0_72 = arith.constant 0 : index
    %c1_73 = arith.constant 1 : index
    %123 = vector.load %arg4[%c0_72, %c1_73] : memref<16x12xf32, #tpu.memory_space<vmem>>, vector<16x1xf32>
    %124 = vector.broadcast %123 : vector<16x1xf32> to vector<16x360xf32>
    %125 = vector.broadcast %122 : vector<1x360xf32> to vector<16x360xf32>
    %126 = arith.mulf %124, %125 : vector<16x360xf32>
    %127 = arith.addf %121, %126 : vector<16x360xf32>
    %c0_74 = arith.constant 0 : index
    %c2_75 = arith.constant 2 : index
    %128 = vector.load %arg11[%c0_74, %c2_75] : memref<4x362xf32, #tpu.memory_space<vmem>>, vector<1x360xf32>
    %c0_76 = arith.constant 0 : index
    %c2_77 = arith.constant 2 : index
    %129 = vector.load %arg4[%c0_76, %c2_77] : memref<16x12xf32, #tpu.memory_space<vmem>>, vector<16x1xf32>
    %130 = vector.broadcast %129 : vector<16x1xf32> to vector<16x360xf32>
    %131 = vector.broadcast %128 : vector<1x360xf32> to vector<16x360xf32>
    %132 = arith.mulf %130, %131 : vector<16x360xf32>
    %133 = arith.addf %127, %132 : vector<16x360xf32>
    %c1_78 = arith.constant 1 : index
    %c0_79 = arith.constant 0 : index
    %134 = vector.load %arg11[%c1_78, %c0_79] : memref<4x362xf32, #tpu.memory_space<vmem>>, vector<1x360xf32>
    %c0_80 = arith.constant 0 : index
    %c3_81 = arith.constant 3 : index
    %135 = vector.load %arg4[%c0_80, %c3_81] : memref<16x12xf32, #tpu.memory_space<vmem>>, vector<16x1xf32>
    %136 = vector.broadcast %135 : vector<16x1xf32> to vector<16x360xf32>
    %137 = vector.broadcast %134 : vector<1x360xf32> to vector<16x360xf32>
    %138 = arith.mulf %136, %137 : vector<16x360xf32>
    %139 = arith.addf %133, %138 : vector<16x360xf32>
    %c1_82 = arith.constant 1 : index
    %c1_83 = arith.constant 1 : index
    %140 = vector.load %arg11[%c1_82, %c1_83] : memref<4x362xf32, #tpu.memory_space<vmem>>, vector<1x360xf32>
    %c0_84 = arith.constant 0 : index
    %c4_85 = arith.constant 4 : index
    %141 = vector.load %arg4[%c0_84, %c4_85] : memref<16x12xf32, #tpu.memory_space<vmem>>, vector<16x1xf32>
    %142 = vector.broadcast %141 : vector<16x1xf32> to vector<16x360xf32>
    %143 = vector.broadcast %140 : vector<1x360xf32> to vector<16x360xf32>
    %144 = arith.mulf %142, %143 : vector<16x360xf32>
    %145 = arith.addf %139, %144 : vector<16x360xf32>
    %c1_86 = arith.constant 1 : index
    %c2_87 = arith.constant 2 : index
    %146 = vector.load %arg11[%c1_86, %c2_87] : memref<4x362xf32, #tpu.memory_space<vmem>>, vector<1x360xf32>
    %c0_88 = arith.constant 0 : index
    %c5_89 = arith.constant 5 : index
    %147 = vector.load %arg4[%c0_88, %c5_89] : memref<16x12xf32, #tpu.memory_space<vmem>>, vector<16x1xf32>
    %148 = vector.broadcast %147 : vector<16x1xf32> to vector<16x360xf32>
    %149 = vector.broadcast %146 : vector<1x360xf32> to vector<16x360xf32>
    %150 = arith.mulf %148, %149 : vector<16x360xf32>
    %151 = arith.addf %145, %150 : vector<16x360xf32>
    %c2_90 = arith.constant 2 : index
    %c0_91 = arith.constant 0 : index
    %152 = vector.load %arg11[%c2_90, %c0_91] : memref<4x362xf32, #tpu.memory_space<vmem>>, vector<1x360xf32>
    %c0_92 = arith.constant 0 : index
    %c6_93 = arith.constant 6 : index
    %153 = vector.load %arg4[%c0_92, %c6_93] : memref<16x12xf32, #tpu.memory_space<vmem>>, vector<16x1xf32>
    %154 = vector.broadcast %153 : vector<16x1xf32> to vector<16x360xf32>
    %155 = vector.broadcast %152 : vector<1x360xf32> to vector<16x360xf32>
    %156 = arith.mulf %154, %155 : vector<16x360xf32>
    %157 = arith.addf %151, %156 : vector<16x360xf32>
    %c2_94 = arith.constant 2 : index
    %c1_95 = arith.constant 1 : index
    %158 = vector.load %arg11[%c2_94, %c1_95] : memref<4x362xf32, #tpu.memory_space<vmem>>, vector<1x360xf32>
    %c0_96 = arith.constant 0 : index
    %c7_97 = arith.constant 7 : index
    %159 = vector.load %arg4[%c0_96, %c7_97] : memref<16x12xf32, #tpu.memory_space<vmem>>, vector<16x1xf32>
    %160 = vector.broadcast %159 : vector<16x1xf32> to vector<16x360xf32>
    %161 = vector.broadcast %158 : vector<1x360xf32> to vector<16x360xf32>
    %162 = arith.mulf %160, %161 : vector<16x360xf32>
    %163 = arith.addf %157, %162 : vector<16x360xf32>
    %c2_98 = arith.constant 2 : index
    %c2_99 = arith.constant 2 : index
    %164 = vector.load %arg11[%c2_98, %c2_99] : memref<4x362xf32, #tpu.memory_space<vmem>>, vector<1x360xf32>
    %c0_100 = arith.constant 0 : index
    %c8_101 = arith.constant 8 : index
    %165 = vector.load %arg4[%c0_100, %c8_101] : memref<16x12xf32, #tpu.memory_space<vmem>>, vector<16x1xf32>
    %166 = vector.broadcast %165 : vector<16x1xf32> to vector<16x360xf32>
    %167 = vector.broadcast %164 : vector<1x360xf32> to vector<16x360xf32>
    %168 = arith.mulf %166, %167 : vector<16x360xf32>
    %169 = arith.addf %163, %168 : vector<16x360xf32>
    %c3_102 = arith.constant 3 : index
    %c0_103 = arith.constant 0 : index
    %170 = vector.load %arg11[%c3_102, %c0_103] : memref<4x362xf32, #tpu.memory_space<vmem>>, vector<1x360xf32>
    %c0_104 = arith.constant 0 : index
    %c9_105 = arith.constant 9 : index
    %171 = vector.load %arg4[%c0_104, %c9_105] : memref<16x12xf32, #tpu.memory_space<vmem>>, vector<16x1xf32>
    %172 = vector.broadcast %171 : vector<16x1xf32> to vector<16x360xf32>
    %173 = vector.broadcast %170 : vector<1x360xf32> to vector<16x360xf32>
    %174 = arith.mulf %172, %173 : vector<16x360xf32>
    %175 = arith.addf %169, %174 : vector<16x360xf32>
    %c3_106 = arith.constant 3 : index
    %c1_107 = arith.constant 1 : index
    %176 = vector.load %arg11[%c3_106, %c1_107] : memref<4x362xf32, #tpu.memory_space<vmem>>, vector<1x360xf32>
    %c0_108 = arith.constant 0 : index
    %c10_109 = arith.constant 10 : index
    %177 = vector.load %arg4[%c0_108, %c10_109] : memref<16x12xf32, #tpu.memory_space<vmem>>, vector<16x1xf32>
    %178 = vector.broadcast %177 : vector<16x1xf32> to vector<16x360xf32>
    %179 = vector.broadcast %176 : vector<1x360xf32> to vector<16x360xf32>
    %180 = arith.mulf %178, %179 : vector<16x360xf32>
    %181 = arith.addf %175, %180 : vector<16x360xf32>
    %c3_110 = arith.constant 3 : index
    %c2_111 = arith.constant 2 : index
    %182 = vector.load %arg11[%c3_110, %c2_111] : memref<4x362xf32, #tpu.memory_space<vmem>>, vector<1x360xf32>
    %c0_112 = arith.constant 0 : index
    %c11_113 = arith.constant 11 : index
    %183 = vector.load %arg4[%c0_112, %c11_113] : memref<16x12xf32, #tpu.memory_space<vmem>>, vector<16x1xf32>
    %184 = vector.broadcast %183 : vector<16x1xf32> to vector<16x360xf32>
    %185 = vector.broadcast %182 : vector<1x360xf32> to vector<16x360xf32>
    %186 = arith.mulf %184, %185 : vector<16x360xf32>
    %187 = arith.addf %181, %186 : vector<16x360xf32>
    %c0_114 = arith.constant 0 : index
    %c0_115 = arith.constant 0 : index
    %188 = vector.load %arg9[%c0_114, %c0_115] : memref<1x360xf32, #tpu.memory_space<vmem>>, vector<1x360xf32>
    %189 = vector.broadcast %188 : vector<1x360xf32> to vector<16x360xf32>
    %190 = arith.mulf %187, %189 : vector<16x360xf32>
    %cst_116 = arith.constant dense<0.000000e+00> : vector<16xf32>
    %191 = vector.multi_reduction <add>, %190, %cst_116 [1] : vector<16x360xf32> to vector<16xf32>
    %192 = vector.shape_cast %191 : vector<16xf32> to vector<16x1xf32>
    %cst_117 = arith.constant 0.00308641978 : f32
    %193 = vector.broadcast %cst_117 : f32 to vector<16x1xf32>
    %194 = arith.mulf %192, %193 : vector<16x1xf32>
    %195 = vector.broadcast %194 : vector<16x1xf32> to vector<16x360xf32>
    %196 = arith.subf %187, %195 : vector<16x360xf32>
    %197 = arith.mulf %196, %196 : vector<16x360xf32>
    %198 = vector.broadcast %188 : vector<1x360xf32> to vector<16x360xf32>
    %199 = arith.mulf %197, %198 : vector<16x360xf32>
    %cst_118 = arith.constant dense<0.000000e+00> : vector<16xf32>
    %200 = vector.multi_reduction <add>, %199, %cst_118 [1] : vector<16x360xf32> to vector<16xf32>
    %201 = vector.shape_cast %200 : vector<16xf32> to vector<16x1xf32>
    %cst_119 = arith.constant 0.00308641978 : f32
    %202 = vector.broadcast %cst_119 : f32 to vector<16x1xf32>
    %203 = arith.mulf %201, %202 : vector<16x1xf32>
    %cst_120 = arith.constant 9.99999974E-6 : f32
    %204 = vector.broadcast %cst_120 : f32 to vector<16x1xf32>
    %205 = arith.addf %203, %204 : vector<16x1xf32>
    %206 = math.rsqrt %205 : vector<16x1xf32>
    %c0_121 = arith.constant 0 : index
    %c0_122 = arith.constant 0 : index
    %207 = vector.load %arg6[%c0_121, %c0_122] : memref<16x1xf32, #tpu.memory_space<vmem>>, vector<16x1xf32>
    %208 = arith.mulf %206, %207 : vector<16x1xf32>
    %209 = vector.broadcast %208 : vector<16x1xf32> to vector<16x360xf32>
    %210 = arith.mulf %196, %209 : vector<16x360xf32>
    %c0_123 = arith.constant 0 : index
    %c0_124 = arith.constant 0 : index
    %211 = vector.load %arg7[%c0_123, %c0_124] : memref<16x1xf32, #tpu.memory_space<vmem>>, vector<16x1xf32>
    %212 = vector.broadcast %211 : vector<16x1xf32> to vector<16x360xf32>
    %213 = arith.addf %210, %212 : vector<16x360xf32>
    %c0_125 = arith.constant 0 : index
    %c0_126 = arith.constant 0 : index
    %c0_127 = arith.constant 0 : index
    %214 = vector.load %arg10[%c0_125, %c0_126, %c0_127] : memref<1x16x360xf32, #tpu.memory_space<vmem>>, vector<1x16x360xf32>
    %215 = vector.shape_cast %214 : vector<1x16x360xf32> to vector<16x360xf32>
    %216 = vector.shape_cast %213 : vector<16x360xf32> to vector<1x16x360xf32>
    tpu.vector_store %arg10[%c0_125, %c0_126, %c0_127], %216 {strides = array<i32>} : memref<1x16x360xf32, #tpu.memory_space<vmem>>, vector<1x16x360xf32>,
    return
  }
  func.func @transform_0(%arg0: i32, %arg1: i32) -> (i32, i32, i32) {
    %c0_i32 = arith.constant 0 : i32
    %c0_i32_0 = arith.constant 0 : i32
    %c0_i32_1 = arith.constant 0 : i32
    return %arg0, %c0_i32, %c0_i32_0 : i32, i32, i32
  }
  func.func @transform_1(%arg0: i32, %arg1: i32) -> (i32, i32) {
    %c0_i32 = arith.constant 0 : i32
    %c0_i32_0 = arith.constant 0 : i32
    %c0_i32_1 = arith.constant 0 : i32
    return %c0_i32, %c0_i32_0 : i32, i32
  }
  func.func @transform_2(%arg0: i32, %arg1: i32) -> (i32, i32) {
    %c0_i32 = arith.constant 0 : i32
    %c0_i32_0 = arith.constant 0 : i32
    return %arg1, %c0_i32 : i32, i32
  }
  func.func @transform_3(%arg0: i32, %arg1: i32) -> (i32, i32) {
    %c0_i32 = arith.constant 0 : i32
    %c0_i32_0 = arith.constant 0 : i32
    return %arg1, %c0_i32 : i32, i32
  }
  func.func @transform_4(%arg0: i32, %arg1: i32) -> (i32, i32) {
    %c0_i32 = arith.constant 0 : i32
    %c0_i32_0 = arith.constant 0 : i32
    return %arg1, %c0_i32 : i32, i32
  }
  func.func @transform_5(%arg0: i32, %arg1: i32) -> (i32, i32) {
    %c0_i32 = arith.constant 0 : i32
    %c0_i32_0 = arith.constant 0 : i32
    return %arg1, %c0_i32 : i32, i32
  }
  func.func @transform_6(%arg0: i32, %arg1: i32) -> (i32, i32) {
    %c0_i32 = arith.constant 0 : i32
    %c0_i32_0 = arith.constant 0 : i32
    %c0_i32_1 = arith.constant 0 : i32
    return %c0_i32, %c0_i32_0 : i32, i32
  }
  func.func @transform_7(%arg0: i32, %arg1: i32) -> (i32, i32) {
    %c0_i32 = arith.constant 0 : i32
    %c0_i32_0 = arith.constant 0 : i32
    %c0_i32_1 = arith.constant 0 : i32
    return %c0_i32, %c0_i32_0 : i32, i32
  }
  func.func @transform_8(%arg0: i32, %arg1: i32) -> (i32, i32, i32) {
    %c0_i32 = arith.constant 0 : i32
    %c0_i32_0 = arith.constant 0 : i32
    return %arg0, %arg1, %c0_i32 : i32, i32, i32
  }
}

</mosaic_0001>

<llo_original>
// kernel: tpu_custom_call.1
$region0: #{tpu_custom_call.1}
  #allocation0 [shape = 'u32[]', space=smem, size = 0x4, offset = 0x4, fixed_abs, tag = 'smem constant byte address 0x4 - core index']
  #allocation1 [shape = 'u32[144,128]{1,0:T(1,128)}', space=vmem, size = 0x12000, scoped, tag = 'internal scratch']
  #allocation2 [shape = 'f32[4,362]{1,0:T(4,128)}', space=vmem, size = 0x1800, scoped, tag = 'scratch operand']
  %s0 = inlined_call_operand.vmem [shape: f32[2,4,400], index: 0, kind: input, shape index: {}]
  %s1 = inlined_call_operand.vmem [shape: f32[4,12], index: 1, kind: input, shape index: {}]
  %s2 = inlined_call_operand.vmem [shape: f32[32,12], index: 2, kind: input, shape index: {}]
  %s3 = inlined_call_operand.vmem [shape: f32[32,1], index: 3, kind: input, shape index: {}]
  %s4 = inlined_call_operand.vmem [shape: f32[32,1], index: 4, kind: input, shape index: {}]
  %s5 = inlined_call_operand.vmem [shape: f32[32,1], index: 5, kind: input, shape index: {}]
  %s6 = inlined_call_operand.vmem [shape: f32[1,360], index: 6, kind: input, shape index: {}]
  %s7 = inlined_call_operand.vmem [shape: f32[1,360], index: 7, kind: input, shape index: {}]
  %s8 = inlined_call_operand.hbm [shape: f32[2,32,360], index: 8, kind: output, shape index: {}]
  %s9 = sld [smem:[#allocation0]]
  $region65: #{tpu_custom_call.1} parent=0
    _
  %s11 = ssub.s32 1, %s9
  %s12 = scalar_select 0, %s11, %s9
  $region1: #{tpu_custom_call.1} parent=0
    #allocation3 [shape = 'u8[49152]{0}', space=vmem, size = 0xc000, scoped, tag = 'output window, operand 0']
    #allocation4 [shape = 's32[2]{0}', space=sflag, size = 0x8, scoped, tag = 'scoped memory for tpu_custom_call.1']
    %13 = vsyncpa [#allocation4], 0
    %s14 = scalar_lea.sflag [#allocation4], 1
    %15 = vsyncpa %s14, 0
    loop: start=0, step=1, limit=6
    $region2: #{tpu_custom_call.1} parent=1 // loop_pre_header
      _
    $region3: #{tpu_custom_call.1} parent=1 // loop_header
      %s17 = sphi 0, %s21
      %p18 = scmp.ge.s32.totalorder %s17, 6
      %s24 = sphi 0, %s36
      %s25 = sphi 0, %s32
      %s26 = sphi 0, %s24
      %s27 = sphi 0, %s25
      %s28 = sphi 0, %s26
      %s29 = sphi 0, %s27
      %s39 = sphi 0, %s41
      %s42 = sphi 0, %s39
      %s43 = sphi 0, %s42
      %s59 = sphi 0, %s43
      %s63 = sphi 0, %s63
      %s65 = sphi 0, %s63
      %s66 = sphi 0, %s65
      %s80 = sphi 0, %s66
      %s86 = sphi 0, %s88
      %s89 = sphi 0, %s86
      %s90 = sphi 0, %s89
      %s106 = sphi 0, %s90
      %s112 = sphi 0, %s114
      %s115 = sphi 0, %s112
      %s116 = sphi 0, %s115
      %s132 = sphi 0, %s116
      %s138 = sphi 0, %s140
      %s141 = sphi 0, %s138
      %s142 = sphi 0, %s141
      %s158 = sphi 0, %s142
      %s164 = sphi 0, %s166
      %s167 = sphi 0, %s164
      %s168 = sphi 0, %s167
      %s184 = sphi 0, %s168
      %s188 = sphi 0, %s188
      %s190 = sphi 0, %s188
      %s191 = sphi 0, %s190
      %s205 = sphi 0, %s191
      %s209 = sphi 0, %s209
      %s211 = sphi 0, %s209
      %s212 = sphi 0, %s211
      %s226 = sphi 0, %s212
      %s234 = sphi 0, %s236
      %s237 = sphi 0, %s234
      %s238 = sphi 0, %s237
      %s254 = sphi 0, %s238
    $region4: #{tpu_custom_call.1} parent=1 // loop_header_branch
      %20 = sbr.rel (%p18) target = $region8
    $region5: #{tpu_custom_call.1} parent=1 // loop_body
      %s22 = ssub.s32 %s17, 1
      %s23 = ssub.s32 %s17, 2
      %s30 = sadd.s32 1, %s25
      %p31 = scmp.ge.s32.totalorder %s30, 2
      %s32 = scalar_select %p31, 0, %s30
      %s33 = sadd.s32 1, %s24
      %s34 = scalar_select %p31, %s33, %s24
      %p35 = scmp.ge.s32.totalorder %s34, 2
      %s36 = scalar_select %p35, 0, %s34
      %s37 = ssub.s32 %s24, %s36
      %p38 = scmp.eq.s32.totalorder %s37, 0
      %s40 = sadd.s32 %s39, 1
      %s41 = scalar_select %p38, %s39, %s40
      %p44 = pneg %p38
      %p45 = scmp.eq.s32.totalorder %s17, 3
      %p46 = por %p44, %p45
      %p47 = scmp.ne.s32.totalorder %s39, %s42
      %p48 = scmp.eq.s32.totalorder %s17, 0
      %p49 = por %p47, %p48
      %p50 = scmp.ne.s32.totalorder %s39, %s42
      %p51 = scmp.eq.s32.totalorder %s22, 3
      %p52 = por %p50, %p51
      %p53 = scmp.ne.s32.totalorder %s42, %s43
      %p54 = scmp.eq.s32.totalorder %s22, 0
      %p55 = por %p53, %p54
      %p56 = scmp.ne.s32.totalorder %s42, %s43
      %p57 = scmp.eq.s32.totalorder %s23, 3
      %p58 = por %p56, %p57
      %p60 = scmp.ne.s32.totalorder %s43, %s59
      %p61 = scmp.eq.s32.totalorder %s23, 0
      %p62 = por %p60, %p61
      %s64 = sadd.s32 %s63, 1
      %p67 = scmp.eq.s32.totalorder %s17, 3
      %p68 = scmp.ne.s32.totalorder %s63, %s65
      %p69 = scmp.eq.s32.totalorder %s17, 0
      %p70 = por %p68, %p69
      %p71 = scmp.ne.s32.totalorder %s63, %s65
      %p72 = scmp.eq.s32.totalorder %s22, 3
      %p73 = por %p71, %p72
      %p74 = scmp.ne.s32.totalorder %s65, %s66
      %p75 = scmp.eq.s32.totalorder %s22, 0
      %p76 = por %p74, %p75
      %p77 = scmp.ne.s32.totalorder %s65, %s66
      %p78 = scmp.eq.s32.totalorder %s23, 3
      %p79 = por %p77, %p78
      %p81 = scmp.ne.s32.totalorder %s66, %s80
      %p82 = scmp.eq.s32.totalorder %s23, 0
      %p83 = por %p81, %p82
      %s84 = ssub.s32 %s25, %s32
      %p85 = scmp.eq.s32.totalorder %s84, 0
      %s87 = sadd.s32 %s86, 1
      %s88 = scalar_select %p85, %s86, %s87
      %p91 = pneg %p85
      %p92 = scmp.eq.s32.totalorder %s17, 3
      %p93 = por %p91, %p92
      %p94 = scmp.ne.s32.totalorder %s86, %s89
      %p95 = scmp.eq.s32.totalorder %s17, 0
      %p96 = por %p94, %p95
      %p97 = scmp.ne.s32.totalorder %s86, %s89
      %p98 = scmp.eq.s32.totalorder %s22, 3
      %p99 = por %p97, %p98
      %p100 = scmp.ne.s32.totalorder %s89, %s90
      %p101 = scmp.eq.s32.totalorder %s22, 0
      %p102 = por %p100, %p101
      %p103 = scmp.ne.s32.totalorder %s89, %s90
      %p104 = scmp.eq.s32.totalorder %s23, 3
      %p105 = por %p103, %p104
      %p107 = scmp.ne.s32.totalorder %s90, %s106
      %p108 = scmp.eq.s32.totalorder %s23, 0
      %p109 = por %p107, %p108
      %s110 = ssub.s32 %s25, %s32
      %p111 = scmp.eq.s32.totalorder %s110, 0
      %s113 = sadd.s32 %s112, 1
      %s114 = scalar_select %p111, %s112, %s113
      %p117 = pneg %p111
      %p118 = scmp.eq.s32.totalorder %s17, 3
      %p119 = por %p117, %p118
      %p120 = scmp.ne.s32.totalorder %s112, %s115
      %p121 = scmp.eq.s32.totalorder %s17, 0
      %p122 = por %p120, %p121
      %p123 = scmp.ne.s32.totalorder %s112, %s115
      %p124 = scmp.eq.s32.totalorder %s22, 3
      %p125 = por %p123, %p124
      %p126 = scmp.ne.s32.totalorder %s115, %s116
      %p127 = scmp.eq.s32.totalorder %s22, 0
      %p128 = por %p126, %p127
      %p129 = scmp.ne.s32.totalorder %s115, %s116
      %p130 = scmp.eq.s32.totalorder %s23, 3
      %p131 = por %p129, %p130
      %p133 = scmp.ne.s32.totalorder %s116, %s132
      %p134 = scmp.eq.s32.totalorder %s23, 0
      %p135 = por %p133, %p134
      %s136 = ssub.s32 %s25, %s32
      %p137 = scmp.eq.s32.totalorder %s136, 0
      %s139 = sadd.s32 %s138, 1
      %s140 = scalar_select %p137, %s138, %s139
      %p143 = pneg %p137
      %p144 = scmp.eq.s32.totalorder %s17, 3
      %p145 = por %p143, %p144
      %p146 = scmp.ne.s32.totalorder %s138, %s141
      %p147 = scmp.eq.s32.totalorder %s17, 0
      %p148 = por %p146, %p147
      %p149 = scmp.ne.s32.totalorder %s138, %s141
      %p150 = scmp.eq.s32.totalorder %s22, 3
      %p151 = por %p149, %p150
      %p152 = scmp.ne.s32.totalorder %s141, %s142
      %p153 = scmp.eq.s32.totalorder %s22, 0
      %p154 = por %p152, %p153
      %p155 = scmp.ne.s32.totalorder %s141, %s142
      %p156 = scmp.eq.s32.totalorder %s23, 3
      %p157 = por %p155, %p156
      %p159 = scmp.ne.s32.totalorder %s142, %s158
      %p160 = scmp.eq.s32.totalorder %s23, 0
      %p161 = por %p159, %p160
      %s162 = ssub.s32 %s25, %s32
      %p163 = scmp.eq.s32.totalorder %s162, 0
      %s165 = sadd.s32 %s164, 1
      %s166 = scalar_select %p163, %s164, %s165
      %p169 = pneg %p163
      %p170 = scmp.eq.s32.totalorder %s17, 3
      %p171 = por %p169, %p170
      %p172 = scmp.ne.s32.totalorder %s164, %s167
      %p173 = scmp.eq.s32.totalorder %s17, 0
      %p174 = por %p172, %p173
      %p175 = scmp.ne.s32.totalorder %s164, %s167
      %p176 = scmp.eq.s32.totalorder %s22, 3
      %p177 = por %p175, %p176
      %p178 = scmp.ne.s32.totalorder %s167, %s168
      %p179 = scmp.eq.s32.totalorder %s22, 0
      %p180 = por %p178, %p179
      %p181 = scmp.ne.s32.totalorder %s167, %s168
      %p182 = scmp.eq.s32.totalorder %s23, 3
      %p183 = por %p181, %p182
      %p185 = scmp.ne.s32.totalorder %s168, %s184
      %p186 = scmp.eq.s32.totalorder %s23, 0
      %p187 = por %p185, %p186
      %s189 = sadd.s32 %s188, 1
      %p192 = scmp.eq.s32.totalorder %s17, 3
      %p193 = scmp.ne.s32.totalorder %s188, %s190
      %p194 = scmp.eq.s32.totalorder %s17, 0
      %p195 = por %p193, %p194
      %p196 = scmp.ne.s32.totalorder %s188, %s190
      %p197 = scmp.eq.s32.totalorder %s22, 3
      %p198 = por %p196, %p197
      %p199 = scmp.ne.s32.totalorder %s190, %s191
      %p200 = scmp.eq.s32.totalorder %s22, 0
      %p201 = por %p199, %p200
      %p202 = scmp.ne.s32.totalorder %s190, %s191
      %p203 = scmp.eq.s32.totalorder %s23, 3
      %p204 = por %p202, %p203
      %p206 = scmp.ne.s32.totalorder %s191, %s205
      %p207 = scmp.eq.s32.totalorder %s23, 0
      %p208 = por %p206, %p207
      %s210 = sadd.s32 %s209, 1
      %p213 = scmp.eq.s32.totalorder %s17, 3
      %p214 = scmp.ne.s32.totalorder %s209, %s211
      %p215 = scmp.eq.s32.totalorder %s17, 0
      %p216 = por %p214, %p215
      %p217 = scmp.ne.s32.totalorder %s209, %s211
      %p218 = scmp.eq.s32.totalorder %s22, 3
      %p219 = por %p217, %p218
      %p220 = scmp.ne.s32.totalorder %s211, %s212
      %p221 = scmp.eq.s32.totalorder %s22, 0
      %p222 = por %p220, %p221
      %p223 = scmp.ne.s32.totalorder %s211, %s212
      %p224 = scmp.eq.s32.totalorder %s23, 3
      %p225 = por %p223, %p224
      %p227 = scmp.ne.s32.totalorder %s212, %s226
      %p228 = scmp.eq.s32.totalorder %s23, 0
      %p229 = por %p227, %p228
      %s230 = ssub.s32 %s24, %s36
      %s231 = ssub.s32 %s25, %s32
      %s232 = sor.u32 %s230, %s231
      %p233 = scmp.eq.s32.totalorder %s232, 0
      %s235 = sadd.s32 %s234, 1
      %s236 = scalar_select %p233, %s234, %s235
      %p239 = pneg %p233
      %p240 = scmp.eq.s32.totalorder %s17, 3
      %p241 = por %p239, %p240
      %p242 = scmp.ne.s32.totalorder %s234, %s237
      %p243 = scmp.eq.s32.totalorder %s17, 0
      %p244 = por %p242, %p243
      %p245 = scmp.ne.s32.totalorder %s234, %s237
      %p246 = scmp.eq.s32.totalorder %s22, 3
      %p247 = por %p245, %p246
      %p248 = scmp.ne.s32.totalorder %s237, %s238
      %p249 = scmp.eq.s32.totalorder %s22, 0
      %p250 = por %p248, %p249
      %p251 = scmp.ne.s32.totalorder %s237, %s238
      %p252 = scmp.eq.s32.totalorder %s23, 3
      %p253 = por %p251, %p252
      %p255 = scmp.ne.s32.totalorder %s238, %s254
      %p256 = scmp.eq.s32.totalorder %s23, 0
      %p257 = por %p255, %p256
      %p258 = scmp.le.s32.totalorder 1, %s17
      %p259 = scmp.lt.s32.totalorder %s17, 5
      %p260 = pnand %p258, %p259
      %p261 = pneg %p260
      // Predicated region
      $region9: #{tpu_custom_call.1} parent=5 // pred_check
        _
      $region10: #{tpu_custom_call.1} parent=5 // pred_check_branch
        %263 = sbr.rel (%p260) target = $region12
      $region11: #{tpu_custom_call.1} parent=5 // pred_region
        %s264 = ssub.s32 %s17, 1
        // Predicated region
        $region13: #{tpu_custom_call.1} parent=11 // pred_check
          %p265 = pneg %p76
        $region14: #{tpu_custom_call.1} parent=11 // pred_check_branch
          %267 = sbr.rel (%p265) target = $region16
        $region15: #{tpu_custom_call.1} parent=11 // pred_region
          _
        $region16: #{tpu_custom_call.1} parent=11 // pred_fallthru
          _
        // Predicated region
        $region17: #{tpu_custom_call.1} parent=11 // pred_check
          %p268 = pneg %p201
        $region18: #{tpu_custom_call.1} parent=11 // pred_check_branch
          %270 = sbr.rel (%p268) target = $region20
        $region19: #{tpu_custom_call.1} parent=11 // pred_region
          _
        $region20: #{tpu_custom_call.1} parent=11 // pred_fallthru
          _
        // Predicated region
        $region21: #{tpu_custom_call.1} parent=11 // pred_check
          %p271 = pneg %p222
        $region22: #{tpu_custom_call.1} parent=11 // pred_check_branch
          %273 = sbr.rel (%p271) target = $region24
        $region23: #{tpu_custom_call.1} parent=11 // pred_region
          _
        $region24: #{tpu_custom_call.1} parent=11 // pred_fallthru
          _
      $region12: #{tpu_custom_call.1} parent=5 // pred_fallthru
        _
      %p274 = scmp.lt.s32.totalorder %s17, 4
      // Predicated region
      $region25: #{tpu_custom_call.1} parent=5 // pred_check
        %p275 = pneg %p274
      $region26: #{tpu_custom_call.1} parent=5 // pred_check_branch
        %277 = sbr.rel (%p275) target = $region28
      $region27: #{tpu_custom_call.1} parent=5 // pred_region
        // Predicated region
        $region29: #{tpu_custom_call.1} parent=27 // pred_check
          %p278 = pneg %p49
        $region30: #{tpu_custom_call.1} parent=27 // pred_check_branch
          %280 = sbr.rel (%p278) target = $region32
        $region31: #{tpu_custom_call.1} parent=27 // pred_region
          %p281 = scmp.lt.s32.totalorder %s24, 1
          %s282 = scalar_select %p281, %s24, 1
          %s283 = smul.addr %s282, 4
          %s284 = smul.addr %s283, 4
          %s285 = scalar_lea.vmem %s0, %s284
        $region32: #{tpu_custom_call.1} parent=27 // pred_fallthru
          _
        // Predicated region
        $region33: #{tpu_custom_call.1} parent=27 // pred_check
          %p286 = pneg %p96
        $region34: #{tpu_custom_call.1} parent=27 // pred_check_branch
          %288 = sbr.rel (%p286) target = $region36
        $region35: #{tpu_custom_call.1} parent=27 // pred_region
          %s289 = smul.u32 2, %s25
          %p290 = scmp.lt.s32.totalorder %s289, 3
          %s291 = scalar_select %p290, %s289, 3
          %s292 = smul.addr %s291, 8
          %s293 = scalar_lea.vmem %s2, %s292
          %s294 = smul.u32 2, %s25
        $region36: #{tpu_custom_call.1} parent=27 // pred_fallthru
          _
        // Predicated region
        $region37: #{tpu_custom_call.1} parent=27 // pred_check
          %p295 = pneg %p122
        $region38: #{tpu_custom_call.1} parent=27 // pred_check_branch
          %297 = sbr.rel (%p295) target = $region40
        $region39: #{tpu_custom_call.1} parent=27 // pred_region
          %s298 = smul.u32 2, %s25
          %p299 = scmp.lt.s32.totalorder %s298, 3
          %s300 = scalar_select %p299, %s298, 3
          %s301 = smul.addr %s300, 8
          %s302 = scalar_lea.vmem %s3, %s301
          %s303 = smul.u32 2, %s25
        $region40: #{tpu_custom_call.1} parent=27 // pred_fallthru
          _
        // Predicated region
        $region41: #{tpu_custom_call.1} parent=27 // pred_check
          %p304 = pneg %p148
        $region42: #{tpu_custom_call.1} parent=27 // pred_check_branch
          %306 = sbr.rel (%p304) target = $region44
        $region43: #{tpu_custom_call.1} parent=27 // pred_region
          %s307 = smul.u32 2, %s25
          %p308 = scmp.lt.s32.totalorder %s307, 3
          %s309 = scalar_select %p308, %s307, 3
          %s310 = smul.addr %s309, 8
          %s311 = scalar_lea.vmem %s4, %s310
          %s312 = smul.u32 2, %s25
        $region44: #{tpu_custom_call.1} parent=27 // pred_fallthru
          _
        // Predicated region
        $region45: #{tpu_custom_call.1} parent=27 // pred_check
          %p313 = pneg %p174
        $region46: #{tpu_custom_call.1} parent=27 // pred_check_branch
          %315 = sbr.rel (%p313) target = $region48
        $region47: #{tpu_custom_call.1} parent=27 // pred_region
          %s316 = smul.u32 2, %s25
          %p317 = scmp.lt.s32.totalorder %s316, 3
          %s318 = scalar_select %p317, %s316, 3
          %s319 = smul.addr %s318, 8
          %s320 = scalar_lea.vmem %s5, %s319
          %s321 = smul.u32 2, %s25
        $region48: #{tpu_custom_call.1} parent=27 // pred_fallthru
          _
      $region28: #{tpu_custom_call.1} parent=5 // pred_fallthru
        _
      %p322 = scmp.le.s32.totalorder 1, %s17
      %p323 = scmp.lt.s32.totalorder %s17, 5
      %p324 = pnand %p322, %p323
      %p325 = pneg %p324
      // Predicated region
      $region49: #{tpu_custom_call.1} parent=5 // pred_check
        _
      $region50: #{tpu_custom_call.1} parent=5 // pred_check_branch
        %327 = sbr.rel (%p324) target = $region52
      $region51: #{tpu_custom_call.1} parent=5 // pred_region
        %s328 = ssub.s32 %s17, 1
        %p329 = scmp.lt.s32.totalorder %s26, 1
        %s330 = scalar_select %p329, %s26, 1
        %s331 = smul.addr %s330, 4
        %s332 = smul.addr %s331, 4
        %s333 = scalar_lea.vmem %s0, %s332
        %p334 = pneg %p55
        %p335 = pneg %p52
        %p336 = pneg %p76
        %p337 = pneg %p73
        %s338 = smul.u32 2, %s27
        %p339 = scmp.lt.s32.totalorder %s338, 3
        %s340 = scalar_select %p339, %s338, 3
        %s341 = smul.addr %s340, 8
        %s342 = scalar_lea.vmem %s2, %s341
        %p343 = pneg %p102
        %p344 = pneg %p99
        %s345 = smul.u32 2, %s27
        %p346 = scmp.lt.s32.totalorder %s345, 3
        %s347 = scalar_select %p346, %s345, 3
        %s348 = smul.addr %s347, 8
        %s349 = scalar_lea.vmem %s3, %s348
        %p350 = pneg %p128
        %p351 = pneg %p125
        %s352 = smul.u32 2, %s27
        %p353 = scmp.lt.s32.totalorder %s352, 3
        %s354 = scalar_select %p353, %s352, 3
        %s355 = smul.addr %s354, 8
        %s356 = scalar_lea.vmem %s4, %s355
        %p357 = pneg %p154
        %p358 = pneg %p151
        %s359 = smul.u32 2, %s27
        %p360 = scmp.lt.s32.totalorder %s359, 3
        %s361 = scalar_select %p360, %s359, 3
        %s362 = smul.addr %s361, 8
        %s363 = scalar_lea.vmem %s5, %s362
        %p364 = pneg %p180
        %p365 = pneg %p177
        %p366 = pneg %p201
        %p367 = pneg %p198
        %p368 = pneg %p222
        %p369 = pneg %p219
        %p370 = pneg %p250
        %p371 = pneg %p247
        %s372 = sand.u32 %s237, 1
        %s373 = scalar_lea.sflag [#allocation4], %s372
        %s374 = sand.u32 %s237, 1
        %s375 = smul.addr %s374, 48
        %s376 = scalar_lea.vmem [#allocation3], %s375
        %p377 = scmp.lt.s32.totalorder %s26, 1
        %s378 = scalar_select %p377, %s26, 1
        %s379 = smul.addr %s378, 4
        %s380 = smul.addr %s379, 4
        %s381 = scalar_lea.vmem %s0, %s380
        %s382 = smul.u32 2, %s27
        %p383 = scmp.lt.s32.totalorder %s382, 3
        %s384 = scalar_select %p383, %s382, 3
        %s385 = smul.addr %s384, 8
        %s386 = scalar_lea.vmem %s2, %s385
        %s387 = smul.u32 2, %s27
        %s388 = smul.u32 2, %s27
        %p389 = scmp.lt.s32.totalorder %s388, 3
        %s390 = scalar_select %p389, %s388, 3
        %s391 = smul.addr %s390, 8
        %s392 = scalar_lea.vmem %s3, %s391
        %s393 = smul.u32 2, %s27
        %s394 = smul.u32 2, %s27
        %p395 = scmp.lt.s32.totalorder %s394, 3
        %s396 = scalar_select %p395, %s394, 3
        %s397 = smul.addr %s396, 8
        %s398 = scalar_lea.vmem %s4, %s397
        %s399 = smul.u32 2, %s27
        %s400 = smul.u32 2, %s27
        %p401 = scmp.lt.s32.totalorder %s400, 3
        %s402 = scalar_select %p401, %s400, 3
        %s403 = smul.addr %s402, 8
        %s404 = scalar_lea.vmem %s5, %s403
        %s405 = smul.u32 2, %s27
        %s406 = smul.u32 2, %s27
        %v407 = vld [vmem:[%s381] ss:$4 sm:$0x7]
        %v408 = vmax.f32 %v407, 0.0
        %v409 = vld [vmem:[%s1] sm:$0xf]
        %411 = vset.pattern.permute.xlu0 0
        %412 = vperm.xlu0 %411, %v409
        %v413 = vpop.permute.xlu0 %412
        %v416 = vlaneseq
        %v417 = vshrl.u32 %v416, 7
        %v418 = vsub.s32 0, %v417
        %v419 = vrot.slane %v408, %v418
        %v420 = vlaneseq
        %v421 = vshrl.u32 %v420, 7
        %v422 = vsub.s32 1, %v421
        %v423 = vrot.slane %v408, %v422
        %v424 = vlaneseq
        %v425 = vshrl.u32 %v424, 7
        %v426 = vsub.s32 2, %v425
        %v427 = vrot.slane %v408, %v426
        %v431 = vmul.f32 %v413, %v419
        %v432 = vmul.f32 %v413, %v423
        %v433 = vmul.f32 %v413, %v427
        %v434 = vadd.f32 %v431, 0.0
        %v435 = vadd.f32 %v432, 0.0
        %v436 = vadd.f32 %v433, 0.0
        %437 = vset.pattern.permute.xlu0 1
        %438 = vperm.xlu0 %437, %v409
        %v439 = vpop.permute.xlu0 %438
        %v441 = vmul.f32 %v439, %v419
        %v442 = vmul.f32 %v439, %v423
        %v443 = vmul.f32 %v439, %v427
        %447 = vrot.lane.b32.xlu0 %v441, 108
        %v448 = vpop.permute.xlu0 %447
        %449 = vrot.lane.b32.xlu0 %v442, 108
        %v450 = vpop.permute.xlu0 %449
        %451 = vrot.lane.b32.xlu0 %v443, 108
        %v452 = vpop.permute.xlu0 %451
        %vm453 = vcmask 883712
        %v454 = vsel %vm453, %v448, %v450
        %v455 = vsel %vm453, %v450, %v452
        %v459 = vadd.f32 %v434, %v454
        %v460 = vadd.f32 %v435, %v455
        %v461 = vadd.f32 %v436, %v452
        %v462 = vld [vmem:[%s381] ss:$4 sm:$0xf]
        %v463 = vmax.f32 %v462, 0.0
        %464 = vset.pattern.permute.xlu0 2
        %465 = vperm.xlu0 %464, %v409
        %v466 = vpop.permute.xlu0 %465
        %v469 = vlaneseq
        %v470 = vshrl.u32 %v469, 7
        %v471 = vsub.s32 0, %v470
        %v472 = vrot.slane %v463, %v471
        %v473 = vlaneseq
        %v474 = vshrl.u32 %v473, 7
        %v475 = vsub.s32 1, %v474
        %v476 = vrot.slane %v463, %v475
        %v477 = vlaneseq
        %v478 = vshrl.u32 %v477, 7
        %v479 = vsub.s32 2, %v478
        %v480 = vrot.slane %v463, %v479
        %v481 = vlaneseq
        %v482 = vshrl.u32 %v481, 7
        %v483 = vsub.s32 3, %v482
        %v484 = vrot.slane %v463, %v483
        %v489 = vmul.f32 %v466, %v472
        %v490 = vmul.f32 %v466, %v476
        %v491 = vmul.f32 %v466, %v480
        %v492 = vmul.f32 %v466, %v484
        %497 = vrot.lane.b32.xlu0 %v489, 88
        %v498 = vpop.permute.xlu0 %497
        %499 = vrot.lane.b32.xlu0 %v490, 88
        %v500 = vpop.permute.xlu0 %499
        %501 = vrot.lane.b32.xlu0 %v491, 88
        %v502 = vpop.permute.xlu0 %501
        %503 = vrot.lane.b32.xlu0 %v492, 88
        %v504 = vpop.permute.xlu0 %503
        %vm505 = vcmask 719872
        %v506 = vsel %vm505, %v498, %v500
        %v507 = vsel %vm505, %v500, %v502
        %v508 = vsel %vm505, %v502, %v504
        %v512 = vadd.f32 %v459, %v506
        %v513 = vadd.f32 %v460, %v507
        %v514 = vadd.f32 %v461, %v508
        %s515 = scalar_lea.vmem %s381, 1
        %v516 = vld [vmem:[%s515] ss:$4 sm:$0x7]
        %v517 = vmax.f32 %v516, 0.0
        %518 = vset.pattern.permute.xlu0 3
        %519 = vperm.xlu0 %518, %v409
        %v520 = vpop.permute.xlu0 %519
        %v523 = vlaneseq
        %v524 = vshrl.u32 %v523, 7
        %v525 = vsub.s32 0, %v524
        %v526 = vrot.slane %v517, %v525
        %v527 = vlaneseq
        %v528 = vshrl.u32 %v527, 7
        %v529 = vsub.s32 1, %v528
        %v530 = vrot.slane %v517, %v529
        %v531 = vlaneseq
        %v532 = vshrl.u32 %v531, 7
        %v533 = vsub.s32 2, %v532
        %v534 = vrot.slane %v517, %v533
        %v538 = vmul.f32 %v520, %v526
        %v539 = vmul.f32 %v520, %v530
        %v540 = vmul.f32 %v520, %v534
        %v541 = vadd.f32 %v512, %v538
        %v542 = vadd.f32 %v513, %v539
        %v543 = vadd.f32 %v514, %v540
        %544 = vset.pattern.permute.xlu0 4
        %545 = vperm.xlu0 %544, %v409
        %v546 = vpop.permute.xlu0 %545
        %v548 = vmul.f32 %v546, %v526
        %v549 = vmul.f32 %v546, %v530
        %v550 = vmul.f32 %v546, %v534
        %554 = vrot.lane.b32.xlu0 %v548, 108
        %v555 = vpop.permute.xlu0 %554
        %556 = vrot.lane.b32.xlu0 %v549, 108
        %v557 = vpop.permute.xlu0 %556
        %558 = vrot.lane.b32.xlu0 %v550, 108
        %v559 = vpop.permute.xlu0 %558
        %v560 = vsel %vm453, %v555, %v557
        %v561 = vsel %vm453, %v557, %v559
        %v565 = vadd.f32 %v541, %v560
        %v566 = vadd.f32 %v542, %v561
        %v567 = vadd.f32 %v543, %v559
        %v568 = vld [vmem:[%s515] ss:$4 sm:$0xf]
        %v569 = vmax.f32 %v568, 0.0
        %570 = vset.pattern.permute.xlu0 5
        %571 = vperm.xlu0 %570, %v409
        %v572 = vpop.permute.xlu0 %571
        %v575 = vlaneseq
        %v576 = vshrl.u32 %v575, 7
        %v577 = vsub.s32 0, %v576
        %v578 = vrot.slane %v569, %v577
        %v579 = vlaneseq
        %v580 = vshrl.u32 %v579, 7
        %v581 = vsub.s32 1, %v580
        %v582 = vrot.slane %v569, %v581
        %v583 = vlaneseq
        %v584 = vshrl.u32 %v583, 7
        %v585 = vsub.s32 2, %v584
        %v586 = vrot.slane %v569, %v585
        %v587 = vlaneseq
        %v588 = vshrl.u32 %v587, 7
        %v589 = vsub.s32 3, %v588
        %v590 = vrot.slane %v569, %v589
        %v595 = vmul.f32 %v572, %v578
        %v596 = vmul.f32 %v572, %v582
        %v597 = vmul.f32 %v572, %v586
        %v598 = vmul.f32 %v572, %v590
        %603 = vrot.lane.b32.xlu0 %v595, 88
        %v604 = vpop.permute.xlu0 %603
        %605 = vrot.lane.b32.xlu0 %v596, 88
        %v606 = vpop.permute.xlu0 %605
        %607 = vrot.lane.b32.xlu0 %v597, 88
        %v608 = vpop.permute.xlu0 %607
        %609 = vrot.lane.b32.xlu0 %v598, 88
        %v610 = vpop.permute.xlu0 %609
        %v611 = vsel %vm505, %v604, %v606
        %v612 = vsel %vm505, %v606, %v608
        %v613 = vsel %vm505, %v608, %v610
        %v617 = vadd.f32 %v565, %v611
        %v618 = vadd.f32 %v566, %v612
        %v619 = vadd.f32 %v567, %v613
        %s620 = scalar_lea.vmem %s381, 2
        %v621 = vld [vmem:[%s620] ss:$4 sm:$0x7]
        %v622 = vmax.f32 %v621, 0.0
        %623 = vset.pattern.permute.xlu0 6
        %624 = vperm.xlu0 %623, %v409
        %v625 = vpop.permute.xlu0 %624
        %v628 = vlaneseq
        %v629 = vshrl.u32 %v628, 7
        %v630 = vsub.s32 0, %v629
        %v631 = vrot.slane %v622, %v630
        %v632 = vlaneseq
        %v633 = vshrl.u32 %v632, 7
        %v634 = vsub.s32 1, %v633
        %v635 = vrot.slane %v622, %v634
        %v636 = vlaneseq
        %v637 = vshrl.u32 %v636, 7
        %v638 = vsub.s32 2, %v637
        %v639 = vrot.slane %v622, %v638
        %v643 = vmul.f32 %v625, %v631
        %v644 = vmul.f32 %v625, %v635
        %v645 = vmul.f32 %v625, %v639
        %v646 = vadd.f32 %v617, %v643
        %v647 = vadd.f32 %v618, %v644
        %v648 = vadd.f32 %v619, %v645
        %649 = vset.pattern.permute.xlu0 7
        %650 = vperm.xlu0 %649, %v409
        %v651 = vpop.permute.xlu0 %650
        %v653 = vmul.f32 %v651, %v631
        %v654 = vmul.f32 %v651, %v635
        %v655 = vmul.f32 %v651, %v639
        %659 = vrot.lane.b32.xlu0 %v653, 108
        %v660 = vpop.permute.xlu0 %659
        %661 = vrot.lane.b32.xlu0 %v654, 108
        %v662 = vpop.permute.xlu0 %661
        %663 = vrot.lane.b32.xlu0 %v655, 108
        %v664 = vpop.permute.xlu0 %663
        %v665 = vsel %vm453, %v660, %v662
        %v666 = vsel %vm453, %v662, %v664
        %v670 = vadd.f32 %v646, %v665
        %v671 = vadd.f32 %v647, %v666
        %v672 = vadd.f32 %v648, %v664
        %v673 = vld [vmem:[%s620] ss:$4 sm:$0xf]
        %v674 = vmax.f32 %v673, 0.0
        %675 = vset.pattern.permute.xlu0 8
        %676 = vperm.xlu0 %675, %v409
        %v677 = vpop.permute.xlu0 %676
        %v680 = vlaneseq
        %v681 = vshrl.u32 %v680, 7
        %v682 = vsub.s32 0, %v681
        %v683 = vrot.slane %v674, %v682
        %v684 = vlaneseq
        %v685 = vshrl.u32 %v684, 7
        %v686 = vsub.s32 1, %v685
        %v687 = vrot.slane %v674, %v686
        %v688 = vlaneseq
        %v689 = vshrl.u32 %v688, 7
        %v690 = vsub.s32 2, %v689
        %v691 = vrot.slane %v674, %v690
        %v692 = vlaneseq
        %v693 = vshrl.u32 %v692, 7
        %v694 = vsub.s32 3, %v693
        %v695 = vrot.slane %v674, %v694
        %v700 = vmul.f32 %v677, %v683
        %v701 = vmul.f32 %v677, %v687
        %v702 = vmul.f32 %v677, %v691
        %v703 = vmul.f32 %v677, %v695
        %708 = vrot.lane.b32.xlu0 %v700, 88
        %v709 = vpop.permute.xlu0 %708
        %710 = vrot.lane.b32.xlu0 %v701, 88
        %v711 = vpop.permute.xlu0 %710
        %712 = vrot.lane.b32.xlu0 %v702, 88
        %v713 = vpop.permute.xlu0 %712
        %714 = vrot.lane.b32.xlu0 %v703, 88
        %v715 = vpop.permute.xlu0 %714
        %v716 = vsel %vm505, %v709, %v711
        %v717 = vsel %vm505, %v711, %v713
        %v718 = vsel %vm505, %v713, %v715
        %v722 = vadd.f32 %v670, %v716
        %v723 = vadd.f32 %v671, %v717
        %v724 = vadd.f32 %v672, %v718
        %s725 = scalar_lea.vmem %s381, 3
        %v726 = vld [vmem:[%s725] ss:$4 sm:$0x7]
        %v727 = vmax.f32 %v726, 0.0
        %728 = vset.pattern.permute.xlu0 9
        %729 = vperm.xlu0 %728, %v409
        %v730 = vpop.permute.xlu0 %729
        %v733 = vlaneseq
        %v734 = vshrl.u32 %v733, 7
        %v735 = vsub.s32 0, %v734
        %v736 = vrot.slane %v727, %v735
        %v737 = vlaneseq
        %v738 = vshrl.u32 %v737, 7
        %v739 = vsub.s32 1, %v738
        %v740 = vrot.slane %v727, %v739
        %v741 = vlaneseq
        %v742 = vshrl.u32 %v741, 7
        %v743 = vsub.s32 2, %v742
        %v744 = vrot.slane %v727, %v743
        %v748 = vmul.f32 %v730, %v736
        %v749 = vmul.f32 %v730, %v740
        %v750 = vmul.f32 %v730, %v744
        %v751 = vadd.f32 %v722, %v748
        %v752 = vadd.f32 %v723, %v749
        %v753 = vadd.f32 %v724, %v750
        %754 = vset.pattern.permute.xlu0 10
        %755 = vperm.xlu0 %754, %v409
        %v756 = vpop.permute.xlu0 %755
        %v758 = vmul.f32 %v756, %v736
        %v759 = vmul.f32 %v756, %v740
        %v760 = vmul.f32 %v756, %v744
        %764 = vrot.lane.b32.xlu0 %v758, 108
        %v765 = vpop.permute.xlu0 %764
        %766 = vrot.lane.b32.xlu0 %v759, 108
        %v767 = vpop.permute.xlu0 %766
        %768 = vrot.lane.b32.xlu0 %v760, 108
        %v769 = vpop.permute.xlu0 %768
        %v770 = vsel %vm453, %v765, %v767
        %v771 = vsel %vm453, %v767, %v769
        %v775 = vadd.f32 %v751, %v770
        %v776 = vadd.f32 %v752, %v771
        %v777 = vadd.f32 %v753, %v769
        %v778 = vld [vmem:[%s725] ss:$4 sm:$0xf]
        %v779 = vmax.f32 %v778, 0.0
        %780 = vset.pattern.permute.xlu0 11
        %781 = vperm.xlu0 %780, %v409
        %v782 = vpop.permute.xlu0 %781
        %v785 = vlaneseq
        %v786 = vshrl.u32 %v785, 7
        %v787 = vsub.s32 0, %v786
        %v788 = vrot.slane %v779, %v787
        %v789 = vlaneseq
        %v790 = vshrl.u32 %v789, 7
        %v791 = vsub.s32 1, %v790
        %v792 = vrot.slane %v779, %v791
        %v793 = vlaneseq
        %v794 = vshrl.u32 %v793, 7
        %v795 = vsub.s32 2, %v794
        %v796 = vrot.slane %v779, %v795
        %v797 = vlaneseq
        %v798 = vshrl.u32 %v797, 7
        %v799 = vsub.s32 3, %v798
        %v800 = vrot.slane %v779, %v799
        %v805 = vmul.f32 %v782, %v788
        %v806 = vmul.f32 %v782, %v792
        %v807 = vmul.f32 %v782, %v796
        %v808 = vmul.f32 %v782, %v800
        %813 = vrot.lane.b32.xlu0 %v805, 88
        %v814 = vpop.permute.xlu0 %813
        %815 = vrot.lane.b32.xlu0 %v806, 88
        %v816 = vpop.permute.xlu0 %815
        %817 = vrot.lane.b32.xlu0 %v807, 88
        %v818 = vpop.permute.xlu0 %817
        %819 = vrot.lane.b32.xlu0 %v808, 88
        %v820 = vpop.permute.xlu0 %819
        %v821 = vsel %vm505, %v814, %v816
        %v822 = vsel %vm505, %v816, %v818
        %v823 = vsel %vm505, %v818, %v820
        %v827 = vadd.f32 %v775, %v821
        %v828 = vadd.f32 %v776, %v822
        %v829 = vadd.f32 %v777, %v823
        %830 = vst [vmem:[#allocation2] sm:$0xff] 0.0
        %vm831 = vcmask 863232
        %832 = vst.msk [vmem:[#allocation2 + $0x8] sm:$0xf] %vm831, 0.0
        %v833 = vld [vmem:[%s6] sm:$0x7]
        %v835 = vlaneseq
        %v836 = vshrl.u32 %v835, 7
        %v837 = vsub.s32 0, %v836
        %v838 = vrot.slane %v833, %v837
        %v839 = vlaneseq
        %v840 = vshrl.u32 %v839, 7
        %v841 = vsub.s32 1, %v840
        %v842 = vrot.slane %v833, %v841
        %v843 = vlaneseq
        %v844 = vshrl.u32 %v843, 7
        %v845 = vsub.s32 2, %v844
        %v846 = vrot.slane %v833, %v845
        %v850 = vmul.f32 %v827, %v838
        %v851 = vmul.f32 %v828, %v842
        %v852 = vmul.f32 %v829, %v846
        %v855 = vcombine.low %v850, %v851
        %857 = vst [vmem:[#allocation2] sm:$0xff] %v855
        %vm858 = vcmask 846848
        %859 = vst.msk [vmem:[#allocation2 + $0x8] sm:$0xf] %vm858, %v852
        %v860 = vld [vmem:[#allocation2] ss:$4 sm:$0x7]
        %v861 = vld [vmem:[%s386] sm:$0xff]
        %v862 = vld [vmem:[%s386 + $0x8] sm:$0xff]
        %864 = vset.pattern.permute.xlu0 0
        %865 = vperm.xlu0 %864, %v861
        %v866 = vpop.permute.xlu0 %865
        %869 = vset.pattern.permute.xlu0 0
        %870 = vperm.xlu0 %869, %v862
        %v871 = vpop.permute.xlu0 %870
        %v874 = vlaneseq
        %v875 = vshrl.u32 %v874, 7
        %v876 = vsub.s32 0, %v875
        %v877 = vrot.slane %v860, %v876
        %v878 = vlaneseq
        %v879 = vshrl.u32 %v878, 7
        %v880 = vsub.s32 1, %v879
        %v881 = vrot.slane %v860, %v880
        %v882 = vlaneseq
        %v883 = vshrl.u32 %v882, 7
        %v884 = vsub.s32 2, %v883
        %v885 = vrot.slane %v860, %v884
        %v889 = vmul.f32 %v866, %v877
        %v890 = vmul.f32 %v866, %v881
        %v891 = vmul.f32 %v866, %v885
        %v892 = vmul.f32 %v871, %v877
        %v893 = vmul.f32 %v871, %v881
        %v894 = vmul.f32 %v871, %v885
        %v895 = vadd.f32 %v889, 0.0
        %v896 = vadd.f32 %v890, 0.0
        %v897 = vadd.f32 %v891, 0.0
        %v898 = vadd.f32 %v892, 0.0
        %v899 = vadd.f32 %v893, 0.0
        %v900 = vadd.f32 %v894, 0.0
        %901 = vset.pattern.permute.xlu0 1
        %902 = vperm.xlu0 %901, %v861
        %v903 = vpop.permute.xlu0 %902
        %905 = vset.pattern.permute.xlu0 1
        %906 = vperm.xlu0 %905, %v862
        %v907 = vpop.permute.xlu0 %906
        %v909 = vmul.f32 %v903, %v877
        %v910 = vmul.f32 %v903, %v881
        %v911 = vmul.f32 %v903, %v885
        %v912 = vmul.f32 %v907, %v877
        %v913 = vmul.f32 %v907, %v881
        %v914 = vmul.f32 %v907, %v885
        %921 = vrot.lane.b32.xlu0 %v909, 127
        %v922 = vpop.permute.xlu0 %921
        %923 = vrot.lane.b32.xlu0 %v910, 127
        %v924 = vpop.permute.xlu0 %923
        %925 = vrot.lane.b32.xlu0 %v911, 127
        %v926 = vpop.permute.xlu0 %925
        %927 = vrot.lane.b32.xlu0 %v912, 127
        %v928 = vpop.permute.xlu0 %927
        %929 = vrot.lane.b32.xlu0 %v913, 127
        %v930 = vpop.permute.xlu0 %929
        %931 = vrot.lane.b32.xlu0 %v914, 127
        %v932 = vpop.permute.xlu0 %931
        %vm933 = vcmask 1039360
        %v934 = vsel %vm933, %v922, %v924
        %v935 = vsel %vm933, %v924, %v926
        %v936 = vsel %vm933, %v928, %v930
        %v937 = vsel %vm933, %v930, %v932
        %v944 = vadd.f32 %v895, %v934
        %v945 = vadd.f32 %v896, %v935
        %v946 = vadd.f32 %v897, %v926
        %v947 = vadd.f32 %v898, %v936
        %v948 = vadd.f32 %v899, %v937
        %v949 = vadd.f32 %v900, %v932
        %950 = vset.pattern.permute.xlu0 2
        %951 = vperm.xlu0 %950, %v861
        %v952 = vpop.permute.xlu0 %951
        %954 = vset.pattern.permute.xlu0 2
        %955 = vperm.xlu0 %954, %v862
        %v956 = vpop.permute.xlu0 %955
        %v958 = vmul.f32 %v952, %v877
        %v959 = vmul.f32 %v952, %v881
        %v960 = vmul.f32 %v952, %v885
        %v961 = vmul.f32 %v956, %v877
        %v962 = vmul.f32 %v956, %v881
        %v963 = vmul.f32 %v956, %v885
        %970 = vrot.lane.b32.xlu0 %v958, 126
        %v971 = vpop.permute.xlu0 %970
        %972 = vrot.lane.b32.xlu0 %v959, 126
        %v973 = vpop.permute.xlu0 %972
        %974 = vrot.lane.b32.xlu0 %v960, 126
        %v975 = vpop.permute.xlu0 %974
        %976 = vrot.lane.b32.xlu0 %v961, 126
        %v977 = vpop.permute.xlu0 %976
        %978 = vrot.lane.b32.xlu0 %v962, 126
        %v979 = vpop.permute.xlu0 %978
        %980 = vrot.lane.b32.xlu0 %v963, 126
        %v981 = vpop.permute.xlu0 %980
        %vm982 = vcmask 1031168
        %v983 = vsel %vm982, %v971, %v973
        %v984 = vsel %vm982, %v973, %v975
        %v985 = vsel %vm982, %v977, %v979
        %v986 = vsel %vm982, %v979, %v981
        %v993 = vadd.f32 %v944, %v983
        %v994 = vadd.f32 %v945, %v984
        %v995 = vadd.f32 %v946, %v975
        %v996 = vadd.f32 %v947, %v985
        %v997 = vadd.f32 %v948, %v986
        %v998 = vadd.f32 %v949, %v981
        %s999 = scalar_lea.vmem [#allocation2], 1
        %v1000 = vld [vmem:[%s999] ss:$4 sm:$0x7]
        %1001 = vset.pattern.permute.xlu0 3
        %1002 = vperm.xlu0 %1001, %v861
        %v1003 = vpop.permute.xlu0 %1002
        %1005 = vset.pattern.permute.xlu0 3
        %1006 = vperm.xlu0 %1005, %v862
        %v1007 = vpop.permute.xlu0 %1006
        %v1010 = vlaneseq
        %v1011 = vshrl.u32 %v1010, 7
        %v1012 = vsub.s32 0, %v1011
        %v1013 = vrot.slane %v1000, %v1012
        %v1014 = vlaneseq
        %v1015 = vshrl.u32 %v1014, 7
        %v1016 = vsub.s32 1, %v1015
        %v1017 = vrot.slane %v1000, %v1016
        %v1018 = vlaneseq
        %v1019 = vshrl.u32 %v1018, 7
        %v1020 = vsub.s32 2, %v1019
        %v1021 = vrot.slane %v1000, %v1020
        %v1025 = vmul.f32 %v1003, %v1013
        %v1026 = vmul.f32 %v1003, %v1017
        %v1027 = vmul.f32 %v1003, %v1021
        %v1028 = vmul.f32 %v1007, %v1013
        %v1029 = vmul.f32 %v1007, %v1017
        %v1030 = vmul.f32 %v1007, %v1021
        %v1031 = vadd.f32 %v993, %v1025
        %v1032 = vadd.f32 %v994, %v1026
        %v1033 = vadd.f32 %v995, %v1027
        %v1034 = vadd.f32 %v996, %v1028
        %v1035 = vadd.f32 %v997, %v1029
        %v1036 = vadd.f32 %v998, %v1030
        %1037 = vset.pattern.permute.xlu0 4
        %1038 = vperm.xlu0 %1037, %v861
        %v1039 = vpop.permute.xlu0 %1038
        %1041 = vset.pattern.permute.xlu0 4
        %1042 = vperm.xlu0 %1041, %v862
        %v1043 = vpop.permute.xlu0 %1042
        %v1045 = vmul.f32 %v1039, %v1013
        %v1046 = vmul.f32 %v1039, %v1017
        %v1047 = vmul.f32 %v1039, %v1021
        %v1048 = vmul.f32 %v1043, %v1013
        %v1049 = vmul.f32 %v1043, %v1017
        %v1050 = vmul.f32 %v1043, %v1021
        %1057 = vrot.lane.b32.xlu0 %v1045, 127
        %v1058 = vpop.permute.xlu0 %1057
        %1059 = vrot.lane.b32.xlu0 %v1046, 127
        %v1060 = vpop.permute.xlu0 %1059
        %1061 = vrot.lane.b32.xlu0 %v1047, 127
        %v1062 = vpop.permute.xlu0 %1061
        %1063 = vrot.lane.b32.xlu0 %v1048, 127
        %v1064 = vpop.permute.xlu0 %1063
        %1065 = vrot.lane.b32.xlu0 %v1049, 127
        %v1066 = vpop.permute.xlu0 %1065
        %1067 = vrot.lane.b32.xlu0 %v1050, 127
        %v1068 = vpop.permute.xlu0 %1067
        %v1069 = vsel %vm933, %v1058, %v1060
        %v1070 = vsel %vm933, %v1060, %v1062
        %v1071 = vsel %vm933, %v1064, %v1066
        %v1072 = vsel %vm933, %v1066, %v1068
        %v1079 = vadd.f32 %v1031, %v1069
        %v1080 = vadd.f32 %v1032, %v1070
        %v1081 = vadd.f32 %v1033, %v1062
        %v1082 = vadd.f32 %v1034, %v1071
        %v1083 = vadd.f32 %v1035, %v1072
        %v1084 = vadd.f32 %v1036, %v1068
        %1085 = vset.pattern.permute.xlu0 5
        %1086 = vperm.xlu0 %1085, %v861
        %v1087 = vpop.permute.xlu0 %1086
        %1089 = vset.pattern.permute.xlu0 5
        %1090 = vperm.xlu0 %1089, %v862
        %v1091 = vpop.permute.xlu0 %1090
        %v1093 = vmul.f32 %v1087, %v1013
        %v1094 = vmul.f32 %v1087, %v1017
        %v1095 = vmul.f32 %v1087, %v1021
        %v1096 = vmul.f32 %v1091, %v1013
        %v1097 = vmul.f32 %v1091, %v1017
        %v1098 = vmul.f32 %v1091, %v1021
        %1105 = vrot.lane.b32.xlu0 %v1093, 126
        %v1106 = vpop.permute.xlu0 %1105
        %1107 = vrot.lane.b32.xlu0 %v1094, 126
        %v1108 = vpop.permute.xlu0 %1107
        %1109 = vrot.lane.b32.xlu0 %v1095, 126
        %v1110 = vpop.permute.xlu0 %1109
        %1111 = vrot.lane.b32.xlu0 %v1096, 126
        %v1112 = vpop.permute.xlu0 %1111
        %1113 = vrot.lane.b32.xlu0 %v1097, 126
        %v1114 = vpop.permute.xlu0 %1113
        %1115 = vrot.lane.b32.xlu0 %v1098, 126
        %v1116 = vpop.permute.xlu0 %1115
        %v1117 = vsel %vm982, %v1106, %v1108
        %v1118 = vsel %vm982, %v1108, %v1110
        %v1119 = vsel %vm982, %v1112, %v1114
        %v1120 = vsel %vm982, %v1114, %v1116
        %v1127 = vadd.f32 %v1079, %v1117
        %v1128 = vadd.f32 %v1080, %v1118
        %v1129 = vadd.f32 %v1081, %v1110
        %v1130 = vadd.f32 %v1082, %v1119
        %v1131 = vadd.f32 %v1083, %v1120
        %v1132 = vadd.f32 %v1084, %v1116
        %s1133 = scalar_lea.vmem [#allocation2], 2
        %v1134 = vld [vmem:[%s1133] ss:$4 sm:$0x7]
        %1135 = vset.pattern.permute.xlu0 6
        %1136 = vperm.xlu0 %1135, %v861
        %v1137 = vpop.permute.xlu0 %1136
        %1139 = vset.pattern.permute.xlu0 6
        %1140 = vperm.xlu0 %1139, %v862
        %v1141 = vpop.permute.xlu0 %1140
        %v1144 = vlaneseq
        %v1145 = vshrl.u32 %v1144, 7
        %v1146 = vsub.s32 0, %v1145
        %v1147 = vrot.slane %v1134, %v1146
        %v1148 = vlaneseq
        %v1149 = vshrl.u32 %v1148, 7
        %v1150 = vsub.s32 1, %v1149
        %v1151 = vrot.slane %v1134, %v1150
        %v1152 = vlaneseq
        %v1153 = vshrl.u32 %v1152, 7
        %v1154 = vsub.s32 2, %v1153
        %v1155 = vrot.slane %v1134, %v1154
        %v1159 = vmul.f32 %v1137, %v1147
        %v1160 = vmul.f32 %v1137, %v1151
        %v1161 = vmul.f32 %v1137, %v1155
        %v1162 = vmul.f32 %v1141, %v1147
        %v1163 = vmul.f32 %v1141, %v1151
        %v1164 = vmul.f32 %v1141, %v1155
        %v1165 = vadd.f32 %v1127, %v1159
        %v1166 = vadd.f32 %v1128, %v1160
        %v1167 = vadd.f32 %v1129, %v1161
        %v1168 = vadd.f32 %v1130, %v1162
        %v1169 = vadd.f32 %v1131, %v1163
        %v1170 = vadd.f32 %v1132, %v1164
        %1171 = vset.pattern.permute.xlu0 7
        %1172 = vperm.xlu0 %1171, %v861
        %v1173 = vpop.permute.xlu0 %1172
        %1175 = vset.pattern.permute.xlu0 7
        %1176 = vperm.xlu0 %1175, %v862
        %v1177 = vpop.permute.xlu0 %1176
        %v1179 = vmul.f32 %v1173, %v1147
        %v1180 = vmul.f32 %v1173, %v1151
        %v1181 = vmul.f32 %v1173, %v1155
        %v1182 = vmul.f32 %v1177, %v1147
        %v1183 = vmul.f32 %v1177, %v1151
        %v1184 = vmul.f32 %v1177, %v1155
        %1191 = vrot.lane.b32.xlu0 %v1179, 127
        %v1192 = vpop.permute.xlu0 %1191
        %1193 = vrot.lane.b32.xlu0 %v1180, 127
        %v1194 = vpop.permute.xlu0 %1193
        %1195 = vrot.lane.b32.xlu0 %v1181, 127
        %v1196 = vpop.permute.xlu0 %1195
        %1197 = vrot.lane.b32.xlu0 %v1182, 127
        %v1198 = vpop.permute.xlu0 %1197
        %1199 = vrot.lane.b32.xlu0 %v1183, 127
        %v1200 = vpop.permute.xlu0 %1199
        %1201 = vrot.lane.b32.xlu0 %v1184, 127
        %v1202 = vpop.permute.xlu0 %1201
        %v1203 = vsel %vm933, %v1192, %v1194
        %v1204 = vsel %vm933, %v1194, %v1196
        %v1205 = vsel %vm933, %v1198, %v1200
        %v1206 = vsel %vm933, %v1200, %v1202
        %v1213 = vadd.f32 %v1165, %v1203
        %v1214 = vadd.f32 %v1166, %v1204
        %v1215 = vadd.f32 %v1167, %v1196
        %v1216 = vadd.f32 %v1168, %v1205
        %v1217 = vadd.f32 %v1169, %v1206
        %v1218 = vadd.f32 %v1170, %v1202
        %1219 = vset.pattern.permute.xlu0 8
        %1220 = vperm.xlu0 %1219, %v861
        %v1221 = vpop.permute.xlu0 %1220
        %1223 = vset.pattern.permute.xlu0 8
        %1224 = vperm.xlu0 %1223, %v862
        %v1225 = vpop.permute.xlu0 %1224
        %v1227 = vmul.f32 %v1221, %v1147
        %v1228 = vmul.f32 %v1221, %v1151
        %v1229 = vmul.f32 %v1221, %v1155
        %v1230 = vmul.f32 %v1225, %v1147
        %v1231 = vmul.f32 %v1225, %v1151
        %v1232 = vmul.f32 %v1225, %v1155
        %1239 = vrot.lane.b32.xlu0 %v1227, 126
        %v1240 = vpop.permute.xlu0 %1239
        %1241 = vrot.lane.b32.xlu0 %v1228, 126
        %v1242 = vpop.permute.xlu0 %1241
        %1243 = vrot.lane.b32.xlu0 %v1229, 126
        %v1244 = vpop.permute.xlu0 %1243
        %1245 = vrot.lane.b32.xlu0 %v1230, 126
        %v1246 = vpop.permute.xlu0 %1245
        %1247 = vrot.lane.b32.xlu0 %v1231, 126
        %v1248 = vpop.permute.xlu0 %1247
        %1249 = vrot.lane.b32.xlu0 %v1232, 126
        %v1250 = vpop.permute.xlu0 %1249
        %v1251 = vsel %vm982, %v1240, %v1242
        %v1252 = vsel %vm982, %v1242, %v1244
        %v1253 = vsel %vm982, %v1246, %v1248
        %v1254 = vsel %vm982, %v1248, %v1250
        %v1261 = vadd.f32 %v1213, %v1251
        %v1262 = vadd.f32 %v1214, %v1252
        %v1263 = vadd.f32 %v1215, %v1244
        %v1264 = vadd.f32 %v1216, %v1253
        %v1265 = vadd.f32 %v1217, %v1254
        %v1266 = vadd.f32 %v1218, %v1250
        %s1267 = scalar_lea.vmem [#allocation2], 3
        %v1268 = vld [vmem:[%s1267] ss:$4 sm:$0x7]
        %1269 = vset.pattern.permute.xlu0 9
        %1270 = vperm.xlu0 %1269, %v861
        %v1271 = vpop.permute.xlu0 %1270
        %1273 = vset.pattern.permute.xlu0 9
        %1274 = vperm.xlu0 %1273, %v862
        %v1275 = vpop.permute.xlu0 %1274
        %v1278 = vlaneseq
        %v1279 = vshrl.u32 %v1278, 7
        %v1280 = vsub.s32 0, %v1279
        %v1281 = vrot.slane %v1268, %v1280
        %v1282 = vlaneseq
        %v1283 = vshrl.u32 %v1282, 7
        %v1284 = vsub.s32 1, %v1283
        %v1285 = vrot.slane %v1268, %v1284
        %v1286 = vlaneseq
        %v1287 = vshrl.u32 %v1286, 7
        %v1288 = vsub.s32 2, %v1287
        %v1289 = vrot.slane %v1268, %v1288
        %v1293 = vmul.f32 %v1271, %v1281
        %v1294 = vmul.f32 %v1271, %v1285
        %v1295 = vmul.f32 %v1271, %v1289
        %v1296 = vmul.f32 %v1275, %v1281
        %v1297 = vmul.f32 %v1275, %v1285
        %v1298 = vmul.f32 %v1275, %v1289
        %v1299 = vadd.f32 %v1261, %v1293
        %v1300 = vadd.f32 %v1262, %v1294
        %v1301 = vadd.f32 %v1263, %v1295
        %v1302 = vadd.f32 %v1264, %v1296
        %v1303 = vadd.f32 %v1265, %v1297
        %v1304 = vadd.f32 %v1266, %v1298
        %1305 = vset.pattern.permute.xlu0 10
        %1306 = vperm.xlu0 %1305, %v861
        %v1307 = vpop.permute.xlu0 %1306
        %1309 = vset.pattern.permute.xlu0 10
        %1310 = vperm.xlu0 %1309, %v862
        %v1311 = vpop.permute.xlu0 %1310
        %v1313 = vmul.f32 %v1307, %v1281
        %v1314 = vmul.f32 %v1307, %v1285
        %v1315 = vmul.f32 %v1307, %v1289
        %v1316 = vmul.f32 %v1311, %v1281
        %v1317 = vmul.f32 %v1311, %v1285
        %v1318 = vmul.f32 %v1311, %v1289
        %1325 = vrot.lane.b32.xlu0 %v1313, 127
        %v1326 = vpop.permute.xlu0 %1325
        %1327 = vrot.lane.b32.xlu0 %v1314, 127
        %v1328 = vpop.permute.xlu0 %1327
        %1329 = vrot.lane.b32.xlu0 %v1315, 127
        %v1330 = vpop.permute.xlu0 %1329
        %1331 = vrot.lane.b32.xlu0 %v1316, 127
        %v1332 = vpop.permute.xlu0 %1331
        %1333 = vrot.lane.b32.xlu0 %v1317, 127
        %v1334 = vpop.permute.xlu0 %1333
        %1335 = vrot.lane.b32.xlu0 %v1318, 127
        %v1336 = vpop.permute.xlu0 %1335
        %v1337 = vsel %vm933, %v1326, %v1328
        %v1338 = vsel %vm933, %v1328, %v1330
        %v1339 = vsel %vm933, %v1332, %v1334
        %v1340 = vsel %vm933, %v1334, %v1336
        %v1347 = vadd.f32 %v1299, %v1337
        %v1348 = vadd.f32 %v1300, %v1338
        %v1349 = vadd.f32 %v1301, %v1330
        %v1350 = vadd.f32 %v1302, %v1339
        %v1351 = vadd.f32 %v1303, %v1340
        %v1352 = vadd.f32 %v1304, %v1336
        %1353 = vset.pattern.permute.xlu0 11
        %1354 = vperm.xlu0 %1353, %v861
        %v1355 = vpop.permute.xlu0 %1354
        %1357 = vset.pattern.permute.xlu0 11
        %1358 = vperm.xlu0 %1357, %v862
        %v1359 = vpop.permute.xlu0 %1358
        %v1361 = vmul.f32 %v1355, %v1281
        %v1362 = vmul.f32 %v1355, %v1285
        %v1363 = vmul.f32 %v1355, %v1289
        %v1364 = vmul.f32 %v1359, %v1281
        %v1365 = vmul.f32 %v1359, %v1285
        %v1366 = vmul.f32 %v1359, %v1289
        %1373 = vrot.lane.b32.xlu0 %v1361, 126
        %v1374 = vpop.permute.xlu0 %1373
        %1375 = vrot.lane.b32.xlu0 %v1362, 126
        %v1376 = vpop.permute.xlu0 %1375
        %1377 = vrot.lane.b32.xlu0 %v1363, 126
        %v1378 = vpop.permute.xlu0 %1377
        %1379 = vrot.lane.b32.xlu0 %v1364, 126
        %v1380 = vpop.permute.xlu0 %1379
        %1381 = vrot.lane.b32.xlu0 %v1365, 126
        %v1382 = vpop.permute.xlu0 %1381
        %1383 = vrot.lane.b32.xlu0 %v1366, 126
        %v1384 = vpop.permute.xlu0 %1383
        %v1385 = vsel %vm982, %v1374, %v1376
        %v1386 = vsel %vm982, %v1376, %v1378
        %v1387 = vsel %vm982, %v1380, %v1382
        %v1388 = vsel %vm982, %v1382, %v1384
        %v1395 = vadd.f32 %v1347, %v1385
        %v1396 = vadd.f32 %v1348, %v1386
        %v1397 = vadd.f32 %v1349, %v1378
        %v1398 = vadd.f32 %v1350, %v1387
        %v1399 = vadd.f32 %v1351, %v1388
        %v1400 = vadd.f32 %v1352, %v1384
        %v1401 = vld [vmem:[%s7] sm:$0x7]
        %v1403 = vlaneseq
        %v1404 = vshrl.u32 %v1403, 7
        %v1405 = vsub.s32 0, %v1404
        %v1406 = vrot.slane %v1401, %v1405
        %v1407 = vlaneseq
        %v1408 = vshrl.u32 %v1407, 7
        %v1409 = vsub.s32 1, %v1408
        %v1410 = vrot.slane %v1401, %v1409
        %v1411 = vlaneseq
        %v1412 = vshrl.u32 %v1411, 7
        %v1413 = vsub.s32 2, %v1412
        %v1414 = vrot.slane %v1401, %v1413
        %v1418 = vmul.f32 %v1395, %v1406
        %v1419 = vmul.f32 %v1396, %v1410
        %v1420 = vmul.f32 %v1397, %v1414
        %v1421 = vmul.f32 %v1398, %v1406
        %v1422 = vmul.f32 %v1399, %v1410
        %v1423 = vmul.f32 %v1400, %v1414
        %v1424 = vadd.f32 %v1418, %v1419
        %vm1425 = vcmask 850944
        %v1426 = vsel %vm1425, %v1420, 0.0
        %v1427 = vadd.f32 %v1424, %v1426
        %1428 = vadd.xlane.f32.xlu0 %v1427
        %v1429 = vpop.xlane.xlu0 %1428
        %v1430 = vadd.f32 %v1421, %v1422
        %v1431 = vsel %vm1425, %v1423, 0.0
        %v1432 = vadd.f32 %v1430, %v1431
        %1433 = vadd.xlane.f32.xlu0 %v1432
        %v1434 = vpop.xlane.xlu0 %1433
        %v1435 = vmul.f32 %v1429, 0.0030864198
        %v1436 = vmul.f32 %v1434, 0.0030864198
        %v1437 = vsub.f32 %v1395, %v1435
        %v1438 = vsub.f32 %v1396, %v1435
        %v1439 = vsub.f32 %v1397, %v1435
        %v1440 = vsub.f32 %v1398, %v1436
        %v1441 = vsub.f32 %v1399, %v1436
        %v1442 = vsub.f32 %v1400, %v1436
        %v1443 = vmul.f32 %v1437, %v1437
        %v1444 = vmul.f32 %v1438, %v1438
        %v1445 = vmul.f32 %v1439, %v1439
        %v1446 = vmul.f32 %v1440, %v1440
        %v1447 = vmul.f32 %v1441, %v1441
        %v1448 = vmul.f32 %v1442, %v1442
        %v1449 = vmul.f32 %v1443, %v1406
        %v1450 = vmul.f32 %v1444, %v1410
        %v1451 = vmul.f32 %v1445, %v1414
        %v1452 = vmul.f32 %v1446, %v1406
        %v1453 = vmul.f32 %v1447, %v1410
        %v1454 = vmul.f32 %v1448, %v1414
        %v1455 = vadd.f32 %v1449, %v1450
        %v1456 = vsel %vm1425, %v1451, 0.0
        %v1457 = vadd.f32 %v1455, %v1456
        %1458 = vadd.xlane.f32.xlu0 %v1457
        %v1459 = vpop.xlane.xlu0 %1458
        %v1460 = vadd.f32 %v1452, %v1453
        %v1461 = vsel %vm1425, %v1454, 0.0
        %v1462 = vadd.f32 %v1460, %v1461
        %1463 = vadd.xlane.f32.xlu0 %v1462
        %v1464 = vpop.xlane.xlu0 %1463
        %v1465 = vmul.f32 %v1459, 0.0030864198
        %v1466 = vmul.f32 %v1464, 0.0030864198
        %v1467 = vadd.f32 %v1465, 1e-05
        %v1468 = vadd.f32 %v1466, 1e-05
        %v1469 = vrsqrt.pop %v1467
        %v1470 = vrsqrt.pop %v1468
        %v1471 = vld [vmem:[%s398] sm:$0xff]
        %v1472 = vld [vmem:[%s398 + $0x8] sm:$0xff]
        %v1473 = vmul.f32 %v1469, %v1471
        %v1474 = vmul.f32 %v1470, %v1472
        %1476 = vset.pattern.permute.xlu0 0
        %1477 = vperm.xlu0 %1476, %v1473
        %v1478 = vpop.permute.xlu0 %1477
        %1481 = vset.pattern.permute.xlu0 0
        %1482 = vperm.xlu0 %1481, %v1474
        %v1483 = vpop.permute.xlu0 %1482
        %v1485 = vmul.f32 %v1437, %v1478
        %v1486 = vmul.f32 %v1438, %v1478
        %v1487 = vmul.f32 %v1439, %v1478
        %v1488 = vmul.f32 %v1440, %v1483
        %v1489 = vmul.f32 %v1441, %v1483
        %v1490 = vmul.f32 %v1442, %v1483
        %v1491 = vld [vmem:[%s404] sm:$0xff]
        %v1492 = vld [vmem:[%s404 + $0x8] sm:$0xff]
        %1494 = vset.pattern.permute.xlu0 0
        %1495 = vperm.xlu0 %1494, %v1491
        %v1496 = vpop.permute.xlu0 %1495
        %1499 = vset.pattern.permute.xlu0 0
        %1500 = vperm.xlu0 %1499, %v1492
        %v1501 = vpop.permute.xlu0 %1500
        %v1503 = vadd.f32 %v1485, %v1496
        %v1504 = vadd.f32 %v1486, %v1496
        %v1505 = vadd.f32 %v1487, %v1496
        %v1506 = vadd.f32 %v1488, %v1501
        %v1507 = vadd.f32 %v1489, %v1501
        %v1508 = vadd.f32 %v1490, %v1501
        %1509 = vst [vmem:[%s376] sm:$0xff] %v1503
        %1510 = vst [vmem:[%s376 + $0x8] sm:$0xff] %v1504
        %1511 = vst.msk [vmem:[%s376 + $0x10] sm:$0xff] %vm1425, %v1505
        %1512 = vst [vmem:[%s376 + $0x18] sm:$0xff] %v1506
        %1513 = vst [vmem:[%s376 + $0x20] sm:$0xff] %v1507
        %1514 = vst.msk [vmem:[%s376 + $0x28] sm:$0xff] %vm1425, %v1508
        %s1515 = sand.u32 %s237, 1
        %s1516 = scalar_lea.sflag [#allocation4], %s1515
        %s1517 = sand.u32 %s237, 1
        %s1518 = smul.addr %s1517, 48
        %s1519 = scalar_lea.vmem [#allocation3], %s1518
        // Predicated region
        $region53: #{tpu_custom_call.1} parent=51 // pred_check
          %p1520 = pneg %p247
        $region54: #{tpu_custom_call.1} parent=51 // pred_check_branch
          %1522 = sbr.rel (%p1520) target = $region56
        $region55: #{tpu_custom_call.1} parent=51 // pred_region
          %s1523 = smul.u32 2, %s27
          %s1525 = ssub.s32 768, 768
          %1526 = vsyncadd %s1516, %s1525
          %s1527 = smul.addr %s1523, 3
          %s1528 = smul.addr %s26, 12
          %s1529 = sadd.s32 %s1527, %s1528
          %s1530 = smul.addr %s1529, 128
          %s1531 = scalar_lea.hbm %s8, %s1530
          %s1532 = sshll.u32 %s1519, 4
          %s1533 = int_to_ptr.vmem [resolvable:$true] %s1532
          %1538 = dma.vmem_to_hbm [thread:$0]  %s1533, 768, %s1531, %s1516, 384, 384, 24
        $region56: #{tpu_custom_call.1} parent=51 // pred_fallthru
          _
      $region52: #{tpu_custom_call.1} parent=5 // pred_fallthru
        _
      %p1539 = scmp.le.s32.totalorder 2, %s17
      // Predicated region
      $region57: #{tpu_custom_call.1} parent=5 // pred_check
        %p1540 = pneg %p1539
      $region58: #{tpu_custom_call.1} parent=5 // pred_check_branch
        %1542 = sbr.rel (%p1540) target = $region60
      $region59: #{tpu_custom_call.1} parent=5 // pred_region
        %s1543 = ssub.s32 %s17, 2
        // Predicated region
        $region61: #{tpu_custom_call.1} parent=59 // pred_check
          %p1544 = pneg %p253
        $region62: #{tpu_custom_call.1} parent=59 // pred_check_branch
          %1546 = sbr.rel (%p1544) target = $region64
        $region63: #{tpu_custom_call.1} parent=59 // pred_region
          %s1547 = sand.u32 %s238, 1
          %s1548 = scalar_lea.sflag [#allocation4], %s1547
          %s1549 = sand.u32 %s238, 1
          %s1550 = smul.addr %s1549, 48
          %s1551 = scalar_lea.vmem [#allocation3], %s1550
          %1552 = dma.done %s1548, 768
        $region64: #{tpu_custom_call.1} parent=59 // pred_fallthru
          _
      $region60: #{tpu_custom_call.1} parent=5 // pred_fallthru
        _
    $region6: #{tpu_custom_call.1} parent=1 // loop_footer
      %s21 = sadd.s32 1, %s17
    $region7: #{tpu_custom_call.1} parent=1 // loop_footer_branch
      %16 = sbr.rel target = $region3
    $region8: #{tpu_custom_call.1} parent=1 // loop_exit
      _
    %1553 = vsyncpa [#allocation4], 1
    %s1554 = scalar_lea.sflag [#allocation4], 1
    %1555 = vsyncpa %s1554, 1

</llo_original>
